<compile_context>
chip_gen: v6e
topology: v6e:2x2x1
jax: 0.10.0
libtpu: 0.0.40
codegen_flags: <defaults>
</compile_context>

<pallas_src>
import math
import functools

import jax
import jax.numpy as jnp
from jax.experimental import pallas as pl
from jax.experimental.pallas import tpu as pltpu


def _round_up(n, m):
    return (n + m - 1) // m * m


# --------------------------------- the kernel --------------------------------

def _fpn_kernel(x_ref, mask_ref, pe_ref, g0_ref, b0_ref,
                cw_ref, cb_ref, lg_ref, lb_ref,
                wh_ref, bh_ref,
                xo_ref, mp_ref, lp_ref,
                xs_ref,
                *, num_layers, kernel_size, true_c, x_row):
    T, Cp = x_ref.shape[1], x_ref.shape[2]
    K = kernel_size
    pad = K // 2
    inv_c = 1.0 / float(true_c)

    # One-time zeroing of the conv halo rows of the persistent bf16 scratch.
    # They are never written again, and the scratch persists across grid steps.
    if pad > 0:
        @pl.when(pl.program_id(0) == 0)
        def _():
            z = jnp.zeros((pad, Cp), jnp.bfloat16)
            xs_ref[pl.ds(x_row - pad, pad), :] = z
            xs_ref[pl.ds(x_row + T, pad), :] = z

    def layer_norm(h, gamma, beta, eps=1e-5):
        # ChannelFirstLayerNorm over the true C channels.  Padded lanes of h
        # are exactly 0 by construction (zero-padded inputs/weights/params),
        # so plain lane sums already give true-C statistics: E[x^2] - mu^2
        # form needs NO channel-validity mask multiply.
        mu = jnp.sum(h, axis=-1, keepdims=True) * inv_c
        ex2 = jnp.sum(h * h, axis=-1, keepdims=True) * inv_c
        var = ex2 - mu * mu
        return (h - mu) * jax.lax.rsqrt(var + eps) * gamma + beta

    def gelu(h):
        # tanh-form GELU: routes the transcendental to the (otherwise idle) EUP
        # slot instead of a ~10-op VALU erf polynomial.  |err| vs exact erf-GELU
        # is ~1e-3, inside the bf16-matmul tolerance budget.
        # TODO(synk): use exact erf GELU if lax.erf lowers on the target Mosaic.
        c = math.sqrt(2.0 / math.pi)
        return 0.5 * h * (1.0 + jnp.tanh(c * (h + 0.044715 * (h * h * h))))

    x = x_ref[0].astype(jnp.float32)                                   # (T, Cp)
    # Hoisted time-mask broadcast (JAX does not CSE broadcast_in_dim; reused
    # by every layer and by the two head stores).
    tmask = jnp.broadcast_to(mask_ref[0].astype(jnp.float32), (T, Cp))

    # PositionalEncoding (x + pe, dropout = identity) -> leading LayerNorm ->
    # ResidualBlock's initial x * mask.
    x = layer_norm(x + pe_ref[...], g0_ref[...], b0_ref[...]) * tmask

    # ---- residual layers: Conv1d(C, C, K, padding=K//2) as K accumulated
    #      (Cp, Cp) bf16 MXU matmuls over row-shifted views of ONE bf16 scratch
    #      copy of x (1 store + K loads per layer; no im2col slab). ----
    for l in range(num_layers):
        res = x
        xs_ref[pl.ds(x_row, T), :] = x.astype(jnp.bfloat16)   # tile-aligned store
        acc = jnp.dot(xs_ref[pl.ds(x_row - pad, T), :], cw_ref[l * K + 0],
                      preferred_element_type=jnp.float32)
        for k in range(1, K):
            acc = acc + jnp.dot(xs_ref[pl.ds(x_row - pad + k, T), :],
                                cw_ref[l * K + k],
                                preferred_element_type=jnp.float32)
        y = gelu(acc + cb_ref[l])                  # nn.GELU(); dropout = identity
        x = layer_norm(res + y, lg_ref[l], lb_ref[l]) * tmask

    xo_ref[0] = x.astype(xo_ref.dtype)

    # ---- final 1x1 Conv1d(C -> 2C): ONE fused (Cp, 2Cp) matmul (fills the
    #      256-wide MXU on v6e/v7x); split at the 128-lane boundary so both
    #      output stores stay full and unmasked. ----
    stats = jnp.dot(x.astype(jnp.bfloat16), wh_ref[...],
                    preferred_element_type=jnp.float32) + bh_ref[...]
    mp_ref[0] = (stats[:, :Cp] * tmask).astype(mp_ref.dtype)
    lp_ref[0] = (stats[:, Cp:] * tmask).astype(lp_ref.dtype)


# --------------------------------- wrapper ------------------------------------

def sinusoidal_pe(T, C):
    # Standard (unscaled) sinusoidal PE added to the (B, T, C) input.
    # TODO(synk): verify against the x_vits PositionalEncoding (sqrt(C) scaling
    # of x, max_len) — unscaled x + pe assumed here.
    pos = jnp.arange(T, dtype=jnp.float32)[:, None]
    div = jnp.exp(jnp.arange(0, C, 2, dtype=jnp.float32) * (-math.log(10000.0) / C))
    pe = jnp.zeros((T, C), dtype=jnp.float32)
    pe = pe.at[:, 0::2].set(jnp.sin(pos * div))
    pe = pe.at[:, 1::2].set(jnp.cos(pos * div)[:, : C // 2])
    return pe


def init_params(key, channels, kernel_size, num_layers):
    C, K, L = channels, kernel_size, num_layers
    keys = jax.random.split(key, 4)
    scale = 0.05
    return dict(
        # cw[l, k, c_in, c_out]  <->  torch conv.weight[c_out, c_in, k]
        cw=scale * jax.random.normal(keys[0], (L, K, C, C), jnp.float32),
        cb=scale * jax.random.normal(keys[1], (L, 1, C), jnp.float32),
        lg=jnp.ones((L, 1, C), jnp.float32),     # per-layer LayerNorm gamma
        lb=jnp.zeros((L, 1, C), jnp.float32),    # per-layer LayerNorm beta
        g0=jnp.ones((1, C), jnp.float32),        # leading LayerNorm gamma
        b0=jnp.zeros((1, C), jnp.float32),       # leading LayerNorm beta
        # wout[c_in, c_out]  <->  torch conv.weight[c_out, c_in, 0] (1x1 conv)
        wout=scale * jax.random.normal(keys[2], (C, 2 * C), jnp.float32),
        bout=scale * jax.random.normal(keys[3], (1, 2 * C), jnp.float32),
    )


def _vmem_limit_bytes():
    # Derive the scoped-VMEM limit from the actual chip (64 MiB on v7x,
    # 128 MiB on v5e/v6e) instead of one flat number; leave headroom for
    # compiler-internal scratch.
    try:
        cap = int(pltpu.get_tpu_info().vmem_capacity_bytes)
    except Exception:
        cap = 64 * 1024 * 1024            # conservative fallback
    return max(32 * 1024 * 1024, min(cap * 3 // 4, cap - 24 * 1024 * 1024))


def _const_spec(shape):
    # Grid-invariant operand: constant index_map (loaded once, never re-DMA'd).
    # Single-buffer it to halve its VMEM footprint; fall back to the default
    # if this Pallas build rejects buffer_count=1.
    index_map = lambda b: (0,) * len(shape)
    if hasattr(pl, "Buffered"):
        try:
            return pl.BlockSpec(shape, index_map, pipeline_mode=pl.Buffered(1))
        except (TypeError, ValueError):
            pass
    return pl.BlockSpec(shape, index_map)


def frame_prior_network(x_bct, mask_b1t, params, *, kernel_size, num_layers):
    B, C, T = x_bct.shape
    K, L = kernel_size, num_layers
    pad = K // 2
    Cp = _round_up(C, 128)          # lane-dense channel axis
    pc = Cp - C
    # NOTE: for true C far below 128 this layout is padding-bound; it is tuned
    # for C >= 128 production shapes (demo C=32 is just a smoke test).

    padc = lambda a: jnp.pad(a, [(0, 0)] * (a.ndim - 1) + [(0, pc)])

    # activations / mask / PE: channels-last + zero lane padding
    x_btc = padc(jnp.transpose(x_bct, (0, 2, 1)).astype(jnp.float32))       # (B, T, Cp)
    mask_bt1 = jnp.transpose(mask_b1t, (0, 2, 1)).astype(jnp.float32)       # (B, T, 1)
    pe = padc(sinusoidal_pe(T, C))                                          # (T, Cp)

    # parameters: zero lane padding (gamma/beta padded with 0 so padded lanes
    # stay exactly 0 through the whole network).
    g0 = padc(params["g0"]); b0 = padc(params["b0"])
    lg = padc(params["lg"]); lb = padc(params["lb"])
    cb = padc(params["cb"])
    # per-tap conv weights, bf16, flattened to (L*K, Cp, Cp) for single-int ref indexing
    cw = jnp.pad(params["cw"], ((0, 0), (0, 0), (0, pc), (0, pc)))
    cw = cw.reshape(L * K, Cp, Cp).astype(jnp.bfloat16)
    # fused head: (Cp, 2Cp) — m_p weights in lanes [0, Cp), logs_p in [Cp, 2Cp)
    wout, bout = params["wout"], params["bout"]
    wh = jnp.concatenate(
        [jnp.pad(wout[:, :C], ((0, pc), (0, pc))),
         jnp.pad(wout[:, C:], ((0, pc), (0, pc)))], axis=1).astype(jnp.bfloat16)
    bh = jnp.concatenate([padc(bout[:, :C]), padc(bout[:, C:])], axis=1)

    # bf16 conv-input scratch: x is stored at a 16-row-aligned offset x_row so
    # the per-layer bf16 store is tile-aligned; rows [x_row-pad, x_row) and
    # [x_row+T, x_row+T+pad) form the zero conv halo (zeroed once).
    x_row = _round_up(pad, 16) if pad > 0 else 0
    xs_rows = x_row + T + pad

    kernel = functools.partial(_fpn_kernel, num_layers=L, kernel_size=K,
                               true_c=C, x_row=x_row)

    grid_spec = pltpu.PrefetchScalarGridSpec(
        num_scalar_prefetch=0,
        grid=(B,),
        in_specs=[
            pl.BlockSpec((1, T, Cp), lambda b: (b, 0, 0)),       # x
            pl.BlockSpec((1, T, 1), lambda b: (b, 0, 0)),        # time mask
            _const_spec((T, Cp)),                                # pe
            _const_spec((1, Cp)), _const_spec((1, Cp)),          # g0, b0
            _const_spec((L * K, Cp, Cp)),                        # conv taps (bf16)
            _const_spec((L, 1, Cp)),                             # conv biases
            _const_spec((L, 1, Cp)), _const_spec((L, 1, Cp)),    # LN gamma / beta
            _const_spec((Cp, 2 * Cp)), _const_spec((1, 2 * Cp)), # fused head W, b
        ],
        out_specs=[
            pl.BlockSpec((1, T, Cp), lambda b: (b, 0, 0)),   # x (block output)
            pl.BlockSpec((1, T, Cp), lambda b: (b, 0, 0)),   # m_p
            pl.BlockSpec((1, T, Cp), lambda b: (b, 0, 0)),   # logs_p
        ],
        scratch_shapes=[pltpu.VMEM((xs_rows, Cp), jnp.bfloat16)],  # persistent x copy
    )

    x_o, m_p, logs_p = pl.pallas_call(
        kernel,
        grid_spec=grid_spec,
        out_shape=(
            jax.ShapeDtypeStruct((B, T, Cp), jnp.float32),
            jax.ShapeDtypeStruct((B, T, Cp), jnp.float32),
            jax.ShapeDtypeStruct((B, T, Cp), jnp.float32),
        ),
        compiler_params=pltpu.CompilerParams(
            dimension_semantics=("parallel",),
            vmem_limit_bytes=_vmem_limit_bytes(),
        ),
    )(x_btc, mask_bt1, pe, g0, b0, cw, cb, lg, lb, wh, bh)

    # strip lane padding, back to PyTorch channel-first convention (B, C, T)
    to_bct = lambda a: jnp.transpose(a[:, :, :C], (0, 2, 1))
    return to_bct(x_o), to_bct(m_p), to_bct(logs_p)


# ----------------------------------- main --------------------------------------

if __name__ == "__main__":
    B, C, T = 2, 32, 16
    kernel_size, num_layers = 5, 2          # dropout = eval-mode identity, cond_channels = 0

    key = jax.random.PRNGKey(0)
    k_x, k_p = jax.random.split(key)

    x = jax.random.normal(k_x, (B, C, T), jnp.float32)     # PyTorch layout (B, C, T)
    # mask (B, 1, T): second sequence padded after t=10
    mask = jnp.ones((B, 1, T), jnp.float32)
    mask = mask.at[1, 0, 10:].set(0.0)

    params = init_params(k_p, C, kernel_size, num_layers)

    x_out, m_p, logs_p = frame_prior_network(
        x, mask, params, kernel_size=kernel_size, num_layers=num_layers)

    jax.block_until_ready((x_out, m_p, logs_p))
    assert x_out.shape == (B, C, T) and m_p.shape == (B, C, T) and logs_p.shape == (B, C, T)
    print("KERNEL_OK")
</pallas_src>

<mosaic_0001>
module attributes {stable_mosaic.version = 11 : i64} {
  func.func @_fpn_kernel(%arg0: i32, %arg1: memref<1x16x128xf32, #tpu.memory_space<vmem>>, %arg2: memref<1x16x1xf32, #tpu.memory_space<vmem>>, %arg3: memref<16x128xf32, #tpu.memory_space<vmem>>, %arg4: memref<1x128xf32, #tpu.memory_space<vmem>>, %arg5: memref<1x128xf32, #tpu.memory_space<vmem>>, %arg6: memref<10x128x128xbf16, #tpu.memory_space<vmem>>, %arg7: memref<2x1x128xf32, #tpu.memory_space<vmem>>, %arg8: memref<2x1x128xf32, #tpu.memory_space<vmem>>, %arg9: memref<2x1x128xf32, #tpu.memory_space<vmem>>, %arg10: memref<128x256xbf16, #tpu.memory_space<vmem>>, %arg11: memref<1x256xf32, #tpu.memory_space<vmem>>, %arg12: memref<1x16x128xf32, #tpu.memory_space<vmem>>, %arg13: memref<1x16x128xf32, #tpu.memory_space<vmem>>, %arg14: memref<1x16x128xf32, #tpu.memory_space<vmem>>, %arg15: memref<34x128xbf16, #tpu.memory_space<vmem>>) attributes {dimension_semantics = [#tpu.dimension_semantics<parallel>], iteration_bounds = array<i64: 2>, scalar_prefetch = 0 : i64, scratch_operands = 1 : i64, tpu.core_type = #tpu.core_type<tc>, window_params = [{transform_indices = @transform_0, window_bounds = array<i64: 1, 16, 128>}, {transform_indices = @transform_1, window_bounds = array<i64: 1, 16, 1>}, {pipeline_mode = #tpu.pipeline_mode<synchronous>, transform_indices = @transform_2, window_bounds = array<i64: 16, 128>}, {pipeline_mode = #tpu.pipeline_mode<synchronous>, transform_indices = @transform_3, window_bounds = array<i64: 1, 128>}, {pipeline_mode = #tpu.pipeline_mode<synchronous>, transform_indices = @transform_4, window_bounds = array<i64: 1, 128>}, {pipeline_mode = #tpu.pipeline_mode<synchronous>, transform_indices = @transform_5, window_bounds = array<i64: 10, 128, 128>}, {pipeline_mode = #tpu.pipeline_mode<synchronous>, transform_indices = @transform_6, window_bounds = array<i64: 2, 1, 128>}, {pipeline_mode = #tpu.pipeline_mode<synchronous>, transform_indices = @transform_7, window_bounds = array<i64: 2, 1, 128>}, {pipeline_mode = #tpu.pipeline_mode<synchronous>, transform_indices = @transform_8, window_bounds = array<i64: 2, 1, 128>}, {pipeline_mode = #tpu.pipeline_mode<synchronous>, transform_indices = @transform_9, window_bounds = array<i64: 128, 256>}, {pipeline_mode = #tpu.pipeline_mode<synchronous>, transform_indices = @transform_10, window_bounds = array<i64: 1, 256>}, {transform_indices = @transform_11, window_bounds = array<i64: 1, 16, 128>}, {transform_indices = @transform_12, window_bounds = array<i64: 1, 16, 128>}, {transform_indices = @transform_13, window_bounds = array<i64: 1, 16, 128>}]} {
    %c0_i32 = arith.constant 0 : i32
    %0 = arith.cmpi eq, %arg0, %c0_i32 : i32
    %1 = arith.extui %0 : i1 to i32
    %c0_i32_0 = arith.constant 0 : i32
    %2 = arith.cmpi ne, %1, %c0_i32_0 : i32
    scf.if %2 {
      %cst_116 = arith.constant 0.000000e+00 : bf16
      %197 = vector.broadcast %cst_116 : bf16 to vector<2x128xbf16>
      %c14_117 = arith.constant 14 : index
      %c0_118 = arith.constant 0 : index
      %198 = vector.load %arg15[%c14_117, %c0_118] : memref<34x128xbf16, #tpu.memory_space<vmem>>, vector<2x128xbf16>
      tpu.vector_store %arg15[%c14_117, %c0_118], %197 {strides = array<i32>} : memref<34x128xbf16, #tpu.memory_space<vmem>>, vector<2x128xbf16>,
      %c32 = arith.constant 32 : index
      %c0_119 = arith.constant 0 : index
      %199 = vector.load %arg15[%c32, %c0_119] : memref<34x128xbf16, #tpu.memory_space<vmem>>, vector<2x128xbf16>
      tpu.vector_store %arg15[%c32, %c0_119], %197 {strides = array<i32>} : memref<34x128xbf16, #tpu.memory_space<vmem>>, vector<2x128xbf16>,
    } else {
    }
    %c0 = arith.constant 0 : index
    %c0_1 = arith.constant 0 : index
    %c0_2 = arith.constant 0 : index
    %3 = vector.load %arg1[%c0, %c0_1, %c0_2] : memref<1x16x128xf32, #tpu.memory_space<vmem>>, vector<1x16x128xf32>
    %4 = vector.shape_cast %3 : vector<1x16x128xf32> to vector<16x128xf32>
    %c0_3 = arith.constant 0 : index
    %c0_4 = arith.constant 0 : index
    %c0_5 = arith.constant 0 : index
    %5 = vector.load %arg2[%c0_3, %c0_4, %c0_5] : memref<1x16x1xf32, #tpu.memory_space<vmem>>, vector<1x16x1xf32>
    %6 = vector.shape_cast %5 : vector<1x16x1xf32> to vector<16x1xf32>
    %7 = vector.shape_cast %6 : vector<16x1xf32> to vector<16x1xf32>
    %8 = vector.broadcast %7 : vector<16x1xf32> to vector<16x128xf32>
    %c0_6 = arith.constant 0 : index
    %c0_7 = arith.constant 0 : index
    %9 = vector.load %arg3[%c0_6, %c0_7] : memref<16x128xf32, #tpu.memory_space<vmem>>, vector<16x128xf32>
    %10 = arith.addf %4, %9 : vector<16x128xf32>
    %c0_8 = arith.constant 0 : index
    %c0_9 = arith.constant 0 : index
    %11 = vector.load %arg4[%c0_8, %c0_9] : memref<1x128xf32, #tpu.memory_space<vmem>>, vector<1x128xf32>
    %c0_10 = arith.constant 0 : index
    %c0_11 = arith.constant 0 : index
    %12 = vector.load %arg5[%c0_10, %c0_11] : memref<1x128xf32, #tpu.memory_space<vmem>>, vector<1x128xf32>
    %cst = arith.constant dense<0.000000e+00> : vector<16xf32>
    %13 = vector.multi_reduction <add>, %10, %cst [1] : vector<16x128xf32> to vector<16xf32>
    %14 = vector.shape_cast %13 : vector<16xf32> to vector<16x1xf32>
    %cst_12 = arith.constant 3.125000e-02 : f32
    %15 = vector.broadcast %cst_12 : f32 to vector<16x1xf32>
    %16 = arith.mulf %14, %15 : vector<16x1xf32>
    %17 = arith.mulf %10, %10 : vector<16x128xf32>
    %cst_13 = arith.constant dense<0.000000e+00> : vector<16xf32>
    %18 = vector.multi_reduction <add>, %17, %cst_13 [1] : vector<16x128xf32> to vector<16xf32>
    %19 = vector.shape_cast %18 : vector<16xf32> to vector<16x1xf32>
    %cst_14 = arith.constant 3.125000e-02 : f32
    %20 = vector.broadcast %cst_14 : f32 to vector<16x1xf32>
    %21 = arith.mulf %19, %20 : vector<16x1xf32>
    %22 = arith.mulf %16, %16 : vector<16x1xf32>
    %23 = arith.subf %21, %22 : vector<16x1xf32>
    %24 = vector.broadcast %16 : vector<16x1xf32> to vector<16x128xf32>
    %25 = arith.subf %10, %24 : vector<16x128xf32>
    %cst_15 = arith.constant 9.99999974E-6 : f32
    %26 = vector.broadcast %cst_15 : f32 to vector<16x1xf32>
    %27 = arith.addf %23, %26 : vector<16x1xf32>
    %28 = math.rsqrt %27 : vector<16x1xf32>
    %29 = vector.broadcast %28 : vector<16x1xf32> to vector<16x128xf32>
    %30 = arith.mulf %25, %29 : vector<16x128xf32>
    %31 = vector.broadcast %11 : vector<1x128xf32> to vector<16x128xf32>
    %32 = arith.mulf %30, %31 : vector<16x128xf32>
    %33 = vector.broadcast %12 : vector<1x128xf32> to vector<16x128xf32>
    %34 = arith.addf %32, %33 : vector<16x128xf32>
    %35 = arith.mulf %34, %8 : vector<16x128xf32>
    %36 = arith.truncf %35 : vector<16x128xf32> to vector<16x128xbf16>
    %c16 = arith.constant 16 : index
    %c0_16 = arith.constant 0 : index
    %37 = vector.load %arg15[%c16, %c0_16] : memref<34x128xbf16, #tpu.memory_space<vmem>>, vector<16x128xbf16>
    tpu.vector_store %arg15[%c16, %c0_16], %36 {strides = array<i32>} : memref<34x128xbf16, #tpu.memory_space<vmem>>, vector<16x128xbf16>,
    %c14 = arith.constant 14 : index
    %c0_17 = arith.constant 0 : index
    %38 = vector.load %arg15[%c14, %c0_17] : memref<34x128xbf16, #tpu.memory_space<vmem>>, vector<16x128xbf16>
    %c0_18 = arith.constant 0 : index
    %c0_19 = arith.constant 0 : index
    %c0_20 = arith.constant 0 : index
    %39 = vector.load %arg6[%c0_18, %c0_19, %c0_20] : memref<10x128x128xbf16, #tpu.memory_space<vmem>>, vector<1x128x128xbf16>
    %40 = vector.shape_cast %39 : vector<1x128x128xbf16> to vector<128x128xbf16>
    %cst_21 = arith.constant dense<0.000000e+00> : vector<16x128xf32>
    %41 = tpu.matmul %38, %40, %cst_21 {dimension_numbers = #tpu.dot_dimension_numbers<[1], [0], [0], [1], [0, 0, 1, 1], [], []>} : vector<16x128xbf16>, vector<128x128xbf16>, vector<16x128xf32> -> vector<16x128xf32>
    %c15 = arith.constant 15 : index
    %c0_22 = arith.constant 0 : index
    %42 = vector.load %arg15[%c15, %c0_22] : memref<34x128xbf16, #tpu.memory_space<vmem>>, vector<16x128xbf16>
    %c1 = arith.constant 1 : index
    %c0_23 = arith.constant 0 : index
    %c0_24 = arith.constant 0 : index
    %43 = vector.load %arg6[%c1, %c0_23, %c0_24] : memref<10x128x128xbf16, #tpu.memory_space<vmem>>, vector<1x128x128xbf16>
    %44 = vector.shape_cast %43 : vector<1x128x128xbf16> to vector<128x128xbf16>
    %cst_25 = arith.constant dense<0.000000e+00> : vector<16x128xf32>
    %45 = tpu.matmul %42, %44, %cst_25 {dimension_numbers = #tpu.dot_dimension_numbers<[1], [0], [0], [1], [0, 0, 1, 1], [], []>} : vector<16x128xbf16>, vector<128x128xbf16>, vector<16x128xf32> -> vector<16x128xf32>
    %46 = arith.addf %41, %45 : vector<16x128xf32>
    %c16_26 = arith.constant 16 : index
    %c0_27 = arith.constant 0 : index
    %47 = vector.load %arg15[%c16_26, %c0_27] : memref<34x128xbf16, #tpu.memory_space<vmem>>, vector<16x128xbf16>
    %c2 = arith.constant 2 : index
    %c0_28 = arith.constant 0 : index
    %c0_29 = arith.constant 0 : index
    %48 = vector.load %arg6[%c2, %c0_28, %c0_29] : memref<10x128x128xbf16, #tpu.memory_space<vmem>>, vector<1x128x128xbf16>
    %49 = vector.shape_cast %48 : vector<1x128x128xbf16> to vector<128x128xbf16>
    %cst_30 = arith.constant dense<0.000000e+00> : vector<16x128xf32>
    %50 = tpu.matmul %47, %49, %cst_30 {dimension_numbers = #tpu.dot_dimension_numbers<[1], [0], [0], [1], [0, 0, 1, 1], [], []>} : vector<16x128xbf16>, vector<128x128xbf16>, vector<16x128xf32> -> vector<16x128xf32>
    %51 = arith.addf %46, %50 : vector<16x128xf32>
    %c17 = arith.constant 17 : index
    %c0_31 = arith.constant 0 : index
    %52 = vector.load %arg15[%c17, %c0_31] : memref<34x128xbf16, #tpu.memory_space<vmem>>, vector<16x128xbf16>
    %c3 = arith.constant 3 : index
    %c0_32 = arith.constant 0 : index
    %c0_33 = arith.constant 0 : index
    %53 = vector.load %arg6[%c3, %c0_32, %c0_33] : memref<10x128x128xbf16, #tpu.memory_space<vmem>>, vector<1x128x128xbf16>
    %54 = vector.shape_cast %53 : vector<1x128x128xbf16> to vector<128x128xbf16>
    %cst_34 = arith.constant dense<0.000000e+00> : vector<16x128xf32>
    %55 = tpu.matmul %52, %54, %cst_34 {dimension_numbers = #tpu.dot_dimension_numbers<[1], [0], [0], [1], [0, 0, 1, 1], [], []>} : vector<16x128xbf16>, vector<128x128xbf16>, vector<16x128xf32> -> vector<16x128xf32>
    %56 = arith.addf %51, %55 : vector<16x128xf32>
    %c18 = arith.constant 18 : index
    %c0_35 = arith.constant 0 : index
    %57 = vector.load %arg15[%c18, %c0_35] : memref<34x128xbf16, #tpu.memory_space<vmem>>, vector<16x128xbf16>
    %c4 = arith.constant 4 : index
    %c0_36 = arith.constant 0 : index
    %c0_37 = arith.constant 0 : index
    %58 = vector.load %arg6[%c4, %c0_36, %c0_37] : memref<10x128x128xbf16, #tpu.memory_space<vmem>>, vector<1x128x128xbf16>
    %59 = vector.shape_cast %58 : vector<1x128x128xbf16> to vector<128x128xbf16>
    %cst_38 = arith.constant dense<0.000000e+00> : vector<16x128xf32>
    %60 = tpu.matmul %57, %59, %cst_38 {dimension_numbers = #tpu.dot_dimension_numbers<[1], [0], [0], [1], [0, 0, 1, 1], [], []>} : vector<16x128xbf16>, vector<128x128xbf16>, vector<16x128xf32> -> vector<16x128xf32>
    %61 = arith.addf %56, %60 : vector<16x128xf32>
    %c0_39 = arith.constant 0 : index
    %c0_40 = arith.constant 0 : index
    %c0_41 = arith.constant 0 : index
    %62 = vector.load %arg7[%c0_39, %c0_40, %c0_41] : memref<2x1x128xf32, #tpu.memory_space<vmem>>, vector<1x1x128xf32>
    %63 = vector.shape_cast %62 : vector<1x1x128xf32> to vector<1x128xf32>
    %64 = vector.broadcast %63 : vector<1x128xf32> to vector<16x128xf32>
    %65 = arith.addf %61, %64 : vector<16x128xf32>
    %cst_42 = arith.constant 5.000000e-01 : f32
    %66 = vector.broadcast %cst_42 : f32 to vector<16x128xf32>
    %67 = arith.mulf %66, %65 : vector<16x128xf32>
    %68 = arith.mulf %65, %65 : vector<16x128xf32>
    %69 = arith.mulf %68, %65 : vector<16x128xf32>
    %cst_43 = arith.constant 4.471500e-02 : f32
    %70 = vector.broadcast %cst_43 : f32 to vector<16x128xf32>
    %71 = arith.mulf %70, %69 : vector<16x128xf32>
    %72 = arith.addf %65, %71 : vector<16x128xf32>
    %cst_44 = arith.constant 0.797884583 : f32
    %73 = vector.broadcast %cst_44 : f32 to vector<16x128xf32>
    %74 = arith.mulf %73, %72 : vector<16x128xf32>
    %75 = math.tanh %74 : vector<16x128xf32>
    %cst_45 = arith.constant 1.000000e+00 : f32
    %76 = vector.broadcast %cst_45 : f32 to vector<16x128xf32>
    %77 = arith.addf %76, %75 : vector<16x128xf32>
    %78 = arith.mulf %67, %77 : vector<16x128xf32>
    %79 = arith.addf %35, %78 : vector<16x128xf32>
    %c0_46 = arith.constant 0 : index
    %c0_47 = arith.constant 0 : index
    %c0_48 = arith.constant 0 : index
    %80 = vector.load %arg8[%c0_46, %c0_47, %c0_48] : memref<2x1x128xf32, #tpu.memory_space<vmem>>, vector<1x1x128xf32>
    %81 = vector.shape_cast %80 : vector<1x1x128xf32> to vector<1x128xf32>
    %c0_49 = arith.constant 0 : index
    %c0_50 = arith.constant 0 : index
    %c0_51 = arith.constant 0 : index
    %82 = vector.load %arg9[%c0_49, %c0_50, %c0_51] : memref<2x1x128xf32, #tpu.memory_space<vmem>>, vector<1x1x128xf32>
    %83 = vector.shape_cast %82 : vector<1x1x128xf32> to vector<1x128xf32>
    %cst_52 = arith.constant dense<0.000000e+00> : vector<16xf32>
    %84 = vector.multi_reduction <add>, %79, %cst_52 [1] : vector<16x128xf32> to vector<16xf32>
    %85 = vector.shape_cast %84 : vector<16xf32> to vector<16x1xf32>
    %cst_53 = arith.constant 3.125000e-02 : f32
    %86 = vector.broadcast %cst_53 : f32 to vector<16x1xf32>
    %87 = arith.mulf %85, %86 : vector<16x1xf32>
    %88 = arith.mulf %79, %79 : vector<16x128xf32>
    %cst_54 = arith.constant dense<0.000000e+00> : vector<16xf32>
    %89 = vector.multi_reduction <add>, %88, %cst_54 [1] : vector<16x128xf32> to vector<16xf32>
    %90 = vector.shape_cast %89 : vector<16xf32> to vector<16x1xf32>
    %cst_55 = arith.constant 3.125000e-02 : f32
    %91 = vector.broadcast %cst_55 : f32 to vector<16x1xf32>
    %92 = arith.mulf %90, %91 : vector<16x1xf32>
    %93 = arith.mulf %87, %87 : vector<16x1xf32>
    %94 = arith.subf %92, %93 : vector<16x1xf32>
    %95 = vector.broadcast %87 : vector<16x1xf32> to vector<16x128xf32>
    %96 = arith.subf %79, %95 : vector<16x128xf32>
    %cst_56 = arith.constant 9.99999974E-6 : f32
    %97 = vector.broadcast %cst_56 : f32 to vector<16x1xf32>
    %98 = arith.addf %94, %97 : vector<16x1xf32>
    %99 = math.rsqrt %98 : vector<16x1xf32>
    %100 = vector.broadcast %99 : vector<16x1xf32> to vector<16x128xf32>
    %101 = arith.mulf %96, %100 : vector<16x128xf32>
    %102 = vector.broadcast %81 : vector<1x128xf32> to vector<16x128xf32>
    %103 = arith.mulf %101, %102 : vector<16x128xf32>
    %104 = vector.broadcast %83 : vector<1x128xf32> to vector<16x128xf32>
    %105 = arith.addf %103, %104 : vector<16x128xf32>
    %106 = arith.mulf %105, %8 : vector<16x128xf32>
    %107 = arith.truncf %106 : vector<16x128xf32> to vector<16x128xbf16>
    %c16_57 = arith.constant 16 : index
    %c0_58 = arith.constant 0 : index
    %108 = vector.load %arg15[%c16_57, %c0_58] : memref<34x128xbf16, #tpu.memory_space<vmem>>, vector<16x128xbf16>
    tpu.vector_store %arg15[%c16_57, %c0_58], %107 {strides = array<i32>} : memref<34x128xbf16, #tpu.memory_space<vmem>>, vector<16x128xbf16>,
    %c14_59 = arith.constant 14 : index
    %c0_60 = arith.constant 0 : index
    %109 = vector.load %arg15[%c14_59, %c0_60] : memref<34x128xbf16, #tpu.memory_space<vmem>>, vector<16x128xbf16>
    %c5 = arith.constant 5 : index
    %c0_61 = arith.constant 0 : index
    %c0_62 = arith.constant 0 : index
    %110 = vector.load %arg6[%c5, %c0_61, %c0_62] : memref<10x128x128xbf16, #tpu.memory_space<vmem>>, vector<1x128x128xbf16>
    %111 = vector.shape_cast %110 : vector<1x128x128xbf16> to vector<128x128xbf16>
    %cst_63 = arith.constant dense<0.000000e+00> : vector<16x128xf32>
    %112 = tpu.matmul %109, %111, %cst_63 {dimension_numbers = #tpu.dot_dimension_numbers<[1], [0], [0], [1], [0, 0, 1, 1], [], []>} : vector<16x128xbf16>, vector<128x128xbf16>, vector<16x128xf32> -> vector<16x128xf32>
    %c15_64 = arith.constant 15 : index
    %c0_65 = arith.constant 0 : index
    %113 = vector.load %arg15[%c15_64, %c0_65] : memref<34x128xbf16, #tpu.memory_space<vmem>>, vector<16x128xbf16>
    %c6 = arith.constant 6 : index
    %c0_66 = arith.constant 0 : index
    %c0_67 = arith.constant 0 : index
    %114 = vector.load %arg6[%c6, %c0_66, %c0_67] : memref<10x128x128xbf16, #tpu.memory_space<vmem>>, vector<1x128x128xbf16>
    %115 = vector.shape_cast %114 : vector<1x128x128xbf16> to vector<128x128xbf16>
    %cst_68 = arith.constant dense<0.000000e+00> : vector<16x128xf32>
    %116 = tpu.matmul %113, %115, %cst_68 {dimension_numbers = #tpu.dot_dimension_numbers<[1], [0], [0], [1], [0, 0, 1, 1], [], []>} : vector<16x128xbf16>, vector<128x128xbf16>, vector<16x128xf32> -> vector<16x128xf32>
    %117 = arith.addf %112, %116 : vector<16x128xf32>
    %c16_69 = arith.constant 16 : index
    %c0_70 = arith.constant 0 : index
    %118 = vector.load %arg15[%c16_69, %c0_70] : memref<34x128xbf16, #tpu.memory_space<vmem>>, vector<16x128xbf16>
    %c7 = arith.constant 7 : index
    %c0_71 = arith.constant 0 : index
    %c0_72 = arith.constant 0 : index
    %119 = vector.load %arg6[%c7, %c0_71, %c0_72] : memref<10x128x128xbf16, #tpu.memory_space<vmem>>, vector<1x128x128xbf16>
    %120 = vector.shape_cast %119 : vector<1x128x128xbf16> to vector<128x128xbf16>
    %cst_73 = arith.constant dense<0.000000e+00> : vector<16x128xf32>
    %121 = tpu.matmul %118, %120, %cst_73 {dimension_numbers = #tpu.dot_dimension_numbers<[1], [0], [0], [1], [0, 0, 1, 1], [], []>} : vector<16x128xbf16>, vector<128x128xbf16>, vector<16x128xf32> -> vector<16x128xf32>
    %122 = arith.addf %117, %121 : vector<16x128xf32>
    %c17_74 = arith.constant 17 : index
    %c0_75 = arith.constant 0 : index
    %123 = vector.load %arg15[%c17_74, %c0_75] : memref<34x128xbf16, #tpu.memory_space<vmem>>, vector<16x128xbf16>
    %c8 = arith.constant 8 : index
    %c0_76 = arith.constant 0 : index
    %c0_77 = arith.constant 0 : index
    %124 = vector.load %arg6[%c8, %c0_76, %c0_77] : memref<10x128x128xbf16, #tpu.memory_space<vmem>>, vector<1x128x128xbf16>
    %125 = vector.shape_cast %124 : vector<1x128x128xbf16> to vector<128x128xbf16>
    %cst_78 = arith.constant dense<0.000000e+00> : vector<16x128xf32>
    %126 = tpu.matmul %123, %125, %cst_78 {dimension_numbers = #tpu.dot_dimension_numbers<[1], [0], [0], [1], [0, 0, 1, 1], [], []>} : vector<16x128xbf16>, vector<128x128xbf16>, vector<16x128xf32> -> vector<16x128xf32>
    %127 = arith.addf %122, %126 : vector<16x128xf32>
    %c18_79 = arith.constant 18 : index
    %c0_80 = arith.constant 0 : index
    %128 = vector.load %arg15[%c18_79, %c0_80] : memref<34x128xbf16, #tpu.memory_space<vmem>>, vector<16x128xbf16>
    %c9 = arith.constant 9 : index
    %c0_81 = arith.constant 0 : index
    %c0_82 = arith.constant 0 : index
    %129 = vector.load %arg6[%c9, %c0_81, %c0_82] : memref<10x128x128xbf16, #tpu.memory_space<vmem>>, vector<1x128x128xbf16>
    %130 = vector.shape_cast %129 : vector<1x128x128xbf16> to vector<128x128xbf16>
    %cst_83 = arith.constant dense<0.000000e+00> : vector<16x128xf32>
    %131 = tpu.matmul %128, %130, %cst_83 {dimension_numbers = #tpu.dot_dimension_numbers<[1], [0], [0], [1], [0, 0, 1, 1], [], []>} : vector<16x128xbf16>, vector<128x128xbf16>, vector<16x128xf32> -> vector<16x128xf32>
    %132 = arith.addf %127, %131 : vector<16x128xf32>
    %c1_84 = arith.constant 1 : index
    %c0_85 = arith.constant 0 : index
    %c0_86 = arith.constant 0 : index
    %133 = vector.load %arg7[%c1_84, %c0_85, %c0_86] : memref<2x1x128xf32, #tpu.memory_space<vmem>>, vector<1x1x128xf32>
    %134 = vector.shape_cast %133 : vector<1x1x128xf32> to vector<1x128xf32>
    %135 = vector.broadcast %134 : vector<1x128xf32> to vector<16x128xf32>
    %136 = arith.addf %132, %135 : vector<16x128xf32>
    %cst_87 = arith.constant 5.000000e-01 : f32
    %137 = vector.broadcast %cst_87 : f32 to vector<16x128xf32>
    %138 = arith.mulf %137, %136 : vector<16x128xf32>
    %139 = arith.mulf %136, %136 : vector<16x128xf32>
    %140 = arith.mulf %139, %136 : vector<16x128xf32>
    %cst_88 = arith.constant 4.471500e-02 : f32
    %141 = vector.broadcast %cst_88 : f32 to vector<16x128xf32>
    %142 = arith.mulf %141, %140 : vector<16x128xf32>
    %143 = arith.addf %136, %142 : vector<16x128xf32>
    %cst_89 = arith.constant 0.797884583 : f32
    %144 = vector.broadcast %cst_89 : f32 to vector<16x128xf32>
    %145 = arith.mulf %144, %143 : vector<16x128xf32>
    %146 = math.tanh %145 : vector<16x128xf32>
    %cst_90 = arith.constant 1.000000e+00 : f32
    %147 = vector.broadcast %cst_90 : f32 to vector<16x128xf32>
    %148 = arith.addf %147, %146 : vector<16x128xf32>
    %149 = arith.mulf %138, %148 : vector<16x128xf32>
    %150 = arith.addf %106, %149 : vector<16x128xf32>
    %c1_91 = arith.constant 1 : index
    %c0_92 = arith.constant 0 : index
    %c0_93 = arith.constant 0 : index
    %151 = vector.load %arg8[%c1_91, %c0_92, %c0_93] : memref<2x1x128xf32, #tpu.memory_space<vmem>>, vector<1x1x128xf32>
    %152 = vector.shape_cast %151 : vector<1x1x128xf32> to vector<1x128xf32>
    %c1_94 = arith.constant 1 : index
    %c0_95 = arith.constant 0 : index
    %c0_96 = arith.constant 0 : index
    %153 = vector.load %arg9[%c1_94, %c0_95, %c0_96] : memref<2x1x128xf32, #tpu.memory_space<vmem>>, vector<1x1x128xf32>
    %154 = vector.shape_cast %153 : vector<1x1x128xf32> to vector<1x128xf32>
    %cst_97 = arith.constant dense<0.000000e+00> : vector<16xf32>
    %155 = vector.multi_reduction <add>, %150, %cst_97 [1] : vector<16x128xf32> to vector<16xf32>
    %156 = vector.shape_cast %155 : vector<16xf32> to vector<16x1xf32>
    %cst_98 = arith.constant 3.125000e-02 : f32
    %157 = vector.broadcast %cst_98 : f32 to vector<16x1xf32>
    %158 = arith.mulf %156, %157 : vector<16x1xf32>
    %159 = arith.mulf %150, %150 : vector<16x128xf32>
    %cst_99 = arith.constant dense<0.000000e+00> : vector<16xf32>
    %160 = vector.multi_reduction <add>, %159, %cst_99 [1] : vector<16x128xf32> to vector<16xf32>
    %161 = vector.shape_cast %160 : vector<16xf32> to vector<16x1xf32>
    %cst_100 = arith.constant 3.125000e-02 : f32
    %162 = vector.broadcast %cst_100 : f32 to vector<16x1xf32>
    %163 = arith.mulf %161, %162 : vector<16x1xf32>
    %164 = arith.mulf %158, %158 : vector<16x1xf32>
    %165 = arith.subf %163, %164 : vector<16x1xf32>
    %166 = vector.broadcast %158 : vector<16x1xf32> to vector<16x128xf32>
    %167 = arith.subf %150, %166 : vector<16x128xf32>
    %cst_101 = arith.constant 9.99999974E-6 : f32
    %168 = vector.broadcast %cst_101 : f32 to vector<16x1xf32>
    %169 = arith.addf %165, %168 : vector<16x1xf32>
    %170 = math.rsqrt %169 : vector<16x1xf32>
    %171 = vector.broadcast %170 : vector<16x1xf32> to vector<16x128xf32>
    %172 = arith.mulf %167, %171 : vector<16x128xf32>
    %173 = vector.broadcast %152 : vector<1x128xf32> to vector<16x128xf32>
    %174 = arith.mulf %172, %173 : vector<16x128xf32>
    %175 = vector.broadcast %154 : vector<1x128xf32> to vector<16x128xf32>
    %176 = arith.addf %174, %175 : vector<16x128xf32>
    %177 = arith.mulf %176, %8 : vector<16x128xf32>
    %c0_102 = arith.constant 0 : index
    %c0_103 = arith.constant 0 : index
    %c0_104 = arith.constant 0 : index
    %178 = vector.load %arg12[%c0_102, %c0_103, %c0_104] : memref<1x16x128xf32, #tpu.memory_space<vmem>>, vector<1x16x128xf32>
    %179 = vector.shape_cast %178 : vector<1x16x128xf32> to vector<16x128xf32>
    %180 = vector.shape_cast %177 : vector<16x128xf32> to vector<1x16x128xf32>
    tpu.vector_store %arg12[%c0_102, %c0_103, %c0_104], %180 {strides = array<i32>} : memref<1x16x128xf32, #tpu.memory_space<vmem>>, vector<1x16x128xf32>,
    %181 = arith.truncf %177 : vector<16x128xf32> to vector<16x128xbf16>
    %c0_105 = arith.constant 0 : index
    %c0_106 = arith.constant 0 : index
    %182 = vector.load %arg10[%c0_105, %c0_106] : memref<128x256xbf16, #tpu.memory_space<vmem>>, vector<128x256xbf16>
    %cst_107 = arith.constant dense<0.000000e+00> : vector<16x256xf32>
    %183 = tpu.matmul %181, %182, %cst_107 {dimension_numbers = #tpu.dot_dimension_numbers<[1], [0], [0], [1], [0, 0, 1, 1], [], []>} : vector<16x128xbf16>, vector<128x256xbf16>, vector<16x256xf32> -> vector<16x256xf32>
    %c0_108 = arith.constant 0 : index
    %c0_109 = arith.constant 0 : index
    %184 = vector.load %arg11[%c0_108, %c0_109] : memref<1x256xf32, #tpu.memory_space<vmem>>, vector<1x256xf32>
    %185 = vector.broadcast %184 : vector<1x256xf32> to vector<16x256xf32>
    %186 = arith.addf %183, %185 : vector<16x256xf32>
    %187 = vector.extract_strided_slice %186 {offsets = [0, 0], sizes = [16, 128], strides = [1, 1]} : vector<16x256xf32> to vector<16x128xf32>
    %188 = arith.mulf %187, %8 : vector<16x128xf32>
    %c0_110 = arith.constant 0 : index
    %c0_111 = arith.constant 0 : index
    %c0_112 = arith.constant 0 : index
    %189 = vector.load %arg13[%c0_110, %c0_111, %c0_112] : memref<1x16x128xf32, #tpu.memory_space<vmem>>, vector<1x16x128xf32>
    %190 = vector.shape_cast %189 : vector<1x16x128xf32> to vector<16x128xf32>
    %191 = vector.shape_cast %188 : vector<16x128xf32> to vector<1x16x128xf32>
    tpu.vector_store %arg13[%c0_110, %c0_111, %c0_112], %191 {strides = array<i32>} : memref<1x16x128xf32, #tpu.memory_space<vmem>>, vector<1x16x128xf32>,
    %192 = vector.extract_strided_slice %186 {offsets = [0, 128], sizes = [16, 128], strides = [1, 1]} : vector<16x256xf32> to vector<16x128xf32>
    %193 = arith.mulf %192, %8 : vector<16x128xf32>
    %c0_113 = arith.constant 0 : index
    %c0_114 = arith.constant 0 : index
    %c0_115 = arith.constant 0 : index
    %194 = vector.load %arg14[%c0_113, %c0_114, %c0_115] : memref<1x16x128xf32, #tpu.memory_space<vmem>>, vector<1x16x128xf32>
    %195 = vector.shape_cast %194 : vector<1x16x128xf32> to vector<16x128xf32>
    %196 = vector.shape_cast %193 : vector<16x128xf32> to vector<1x16x128xf32>
    tpu.vector_store %arg14[%c0_113, %c0_114, %c0_115], %196 {strides = array<i32>} : memref<1x16x128xf32, #tpu.memory_space<vmem>>, vector<1x16x128xf32>,
    return
  }
  func.func @transform_0(%arg0: i32) -> (i32, i32, i32) {
    %c0_i32 = arith.constant 0 : i32
    %c0_i32_0 = arith.constant 0 : i32
    %c0_i32_1 = arith.constant 0 : i32
    return %arg0, %c0_i32, %c0_i32_0 : i32, i32, i32
  }
  func.func @transform_1(%arg0: i32) -> (i32, i32, i32) {
    %c0_i32 = arith.constant 0 : i32
    %c0_i32_0 = arith.constant 0 : i32
    %c0_i32_1 = arith.constant 0 : i32
    return %arg0, %c0_i32, %c0_i32_0 : i32, i32, i32
  }
  func.func @transform_2(%arg0: i32) -> (i32, i32) {
    %c0_i32 = arith.constant 0 : i32
    %c0_i32_0 = arith.constant 0 : i32
    %c0_i32_1 = arith.constant 0 : i32
    return %c0_i32, %c0_i32_0 : i32, i32
  }
  func.func @transform_3(%arg0: i32) -> (i32, i32) {
    %c0_i32 = arith.constant 0 : i32
    %c0_i32_0 = arith.constant 0 : i32
    %c0_i32_1 = arith.constant 0 : i32
    return %c0_i32, %c0_i32_0 : i32, i32
  }
  func.func @transform_4(%arg0: i32) -> (i32, i32) {
    %c0_i32 = arith.constant 0 : i32
    %c0_i32_0 = arith.constant 0 : i32
    %c0_i32_1 = arith.constant 0 : i32
    return %c0_i32, %c0_i32_0 : i32, i32
  }
  func.func @transform_5(%arg0: i32) -> (i32, i32, i32) {
    %c0_i32 = arith.constant 0 : i32
    %c0_i32_0 = arith.constant 0 : i32
    %c0_i32_1 = arith.constant 0 : i32
    %c0_i32_2 = arith.constant 0 : i32
    return %c0_i32, %c0_i32_0, %c0_i32_1 : i32, i32, i32
  }
  func.func @transform_6(%arg0: i32) -> (i32, i32, i32) {
    %c0_i32 = arith.constant 0 : i32
    %c0_i32_0 = arith.constant 0 : i32
    %c0_i32_1 = arith.constant 0 : i32
    %c0_i32_2 = arith.constant 0 : i32
    return %c0_i32, %c0_i32_0, %c0_i32_1 : i32, i32, i32
  }
  func.func @transform_7(%arg0: i32) -> (i32, i32, i32) {
    %c0_i32 = arith.constant 0 : i32
    %c0_i32_0 = arith.constant 0 : i32
    %c0_i32_1 = arith.constant 0 : i32
    %c0_i32_2 = arith.constant 0 : i32
    return %c0_i32, %c0_i32_0, %c0_i32_1 : i32, i32, i32
  }
  func.func @transform_8(%arg0: i32) -> (i32, i32, i32) {
    %c0_i32 = arith.constant 0 : i32
    %c0_i32_0 = arith.constant 0 : i32
    %c0_i32_1 = arith.constant 0 : i32
    %c0_i32_2 = arith.constant 0 : i32
    return %c0_i32, %c0_i32_0, %c0_i32_1 : i32, i32, i32
  }
  func.func @transform_9(%arg0: i32) -> (i32, i32) {
    %c0_i32 = arith.constant 0 : i32
    %c0_i32_0 = arith.constant 0 : i32
    %c0_i32_1 = arith.constant 0 : i32
    return %c0_i32, %c0_i32_0 : i32, i32
  }
  func.func @transform_10(%arg0: i32) -> (i32, i32) {
    %c0_i32 = arith.constant 0 : i32
    %c0_i32_0 = arith.constant 0 : i32
    %c0_i32_1 = arith.constant 0 : i32
    return %c0_i32, %c0_i32_0 : i32, i32
  }
  func.func @transform_11(%arg0: i32) -> (i32, i32, i32) {
    %c0_i32 = arith.constant 0 : i32
    %c0_i32_0 = arith.constant 0 : i32
    %c0_i32_1 = arith.constant 0 : i32
    return %arg0, %c0_i32, %c0_i32_0 : i32, i32, i32
  }
  func.func @transform_12(%arg0: i32) -> (i32, i32, i32) {
    %c0_i32 = arith.constant 0 : i32
    %c0_i32_0 = arith.constant 0 : i32
    %c0_i32_1 = arith.constant 0 : i32
    return %arg0, %c0_i32, %c0_i32_0 : i32, i32, i32
  }
  func.func @transform_13(%arg0: i32) -> (i32, i32, i32) {
    %c0_i32 = arith.constant 0 : i32
    %c0_i32_0 = arith.constant 0 : i32
    %c0_i32_1 = arith.constant 0 : i32
    return %arg0, %c0_i32, %c0_i32_0 : i32, i32, i32
  }
}

</mosaic_0001>

<llo_original>
// kernel: tpu_custom_call.1
$region0: #{tpu_custom_call.1}
  #allocation0 [shape = 'u32[]', space=smem, size = 0x4, offset = 0x4, fixed_abs, tag = 'smem constant byte address 0x4 - core index']
  #allocation1 [shape = 'u32[144,128]{1,0:T(1,128)}', space=vmem, size = 0x12000, scoped, tag = 'internal scratch']
  #allocation2 [shape = 'bf16[34,128]{1,0:T(8,128)(2,1)}', space=vmem, size = 0x2800, scoped, tag = 'scratch operand']
  %s0 = inlined_call_operand.vmem [shape: f32[2,16,128], index: 0, kind: input, shape index: {}]
  %s1 = inlined_call_operand.vmem [shape: f32[2,16,1], index: 1, kind: input, shape index: {}]
  %s2 = inlined_call_operand.hbm [shape: f32[16,128], index: 2, kind: input, shape index: {}]
  %s3 = inlined_call_operand.vmem [shape: f32[1,128], index: 3, kind: input, shape index: {}]
  %s4 = inlined_call_operand.hbm [shape: f32[1,128], index: 4, kind: input, shape index: {}]
  %s5 = inlined_call_operand.hbm [shape: bf16[10,128,128], index: 5, kind: input, shape index: {}]
  %s6 = inlined_call_operand.vmem [shape: f32[2,1,128], index: 6, kind: input, shape index: {}]
  %s7 = inlined_call_operand.vmem [shape: f32[2,1,128], index: 7, kind: input, shape index: {}]
  %s8 = inlined_call_operand.vmem [shape: f32[2,1,128], index: 8, kind: input, shape index: {}]
  %s9 = inlined_call_operand.hbm [shape: bf16[128,256], index: 9, kind: input, shape index: {}]
  %s10 = inlined_call_operand.vmem [shape: f32[1,256], index: 10, kind: input, shape index: {}]
  %s11 = inlined_call_operand.hbm [shape: f32[2,16,128], index: 11, kind: output, shape index: {0}]
  %s12 = inlined_call_operand.hbm [shape: f32[2,16,128], index: 12, kind: output, shape index: {1}]
  %s13 = inlined_call_operand.hbm [shape: f32[2,16,128], index: 13, kind: output, shape index: {2}]
  %14 = xla_tuple %s11, %s12, %s13
  %s15 = sld [smem:[#allocation0]]
  $region113: #{tpu_custom_call.1} parent=0
    _
  %s17 = ssub.s32 1, %s15
  %s18 = scalar_select 0, %s17, %s15
  $region1: #{tpu_custom_call.1} parent=0
    #allocation3 [shape = 'u8[8192]{0}', space=vmem, size = 0x2000, scoped, tag = 'input window, operand 2, single buffered']
    #allocation4 [shape = 's32[2]{0}', space=sflag, size = 0x8, scoped, tag = 'scoped memory for tpu_custom_call.1']
    #allocation5 [shape = 's32[2]{0}', space=sflag, size = 0x8, scoped, tag = 'scoped memory for tpu_custom_call.1']
    #allocation6 [shape = 'u8[512]{0}', space=vmem, size = 0x400, scoped, tag = 'input window, operand 4, single buffered']
    #allocation7 [shape = 's32[1]{0}', space=sflag, size = 0x4, scoped, tag = 'scoped memory for tpu_custom_call.1']
    #allocation8 [shape = 'u8[327680]{0}', space=vmem, size = 0x50000, scoped, tag = 'input window, operand 5, single buffered']
    #allocation9 [shape = 'u8[65536]{0}', space=vmem, size = 0x10000, scoped, tag = 'input window, operand 9, single buffered']
    #allocation10 [shape = 's32[1]{0}', space=sflag, size = 0x4, scoped, tag = 'scoped memory for tpu_custom_call.1']
    #allocation11 [shape = 'u8[16384]{0}', space=vmem, size = 0x4000, scoped, tag = 'output window, operand 0']
    #allocation12 [shape = 'u8[16384]{0}', space=vmem, size = 0x4000, scoped, tag = 'output window, operand 1']
    #allocation13 [shape = 's32[2]{0}', space=sflag, size = 0x8, scoped, tag = 'scoped memory for tpu_custom_call.1']
    #allocation14 [shape = 'u8[16384]{0}', space=vmem, size = 0x4000, scoped, tag = 'output window, operand 2']
    %19 = vsyncpa [#allocation4], 0
    %20 = vsyncpa [#allocation7], 0
    %21 = vsyncpa [#allocation10], 0
    %22 = vsyncpa [#allocation5], 0
    %s23 = scalar_lea.sflag [#allocation5], 1
    %24 = vsyncpa %s23, 0
    %25 = vsyncpa [#allocation13], 0
    %s26 = scalar_lea.sflag [#allocation13], 1
    %27 = vsyncpa %s26, 0
    loop: start=0, step=1, limit=4
    $region2: #{tpu_custom_call.1} parent=1 // loop_pre_header
      _
    $region3: #{tpu_custom_call.1} parent=1 // loop_header
      %s29 = sphi 0, %s33
      %p30 = scmp.ge.s32.totalorder %s29, 4
      %s39 = sphi 0, %s41
      %s42 = sphi 0, %s39
      %s43 = sphi 0, %s42
      %s59 = sphi 0, %s43
      %s65 = sphi 0, %s67
      %s68 = sphi 0, %s65
      %s69 = sphi 0, %s68
      %s85 = sphi 0, %s69
      %s89 = sphi 0, %s89
      %s91 = sphi 0, %s89
      %s92 = sphi 0, %s91
      %s106 = sphi 0, %s92
      %s110 = sphi 0, %s110
      %s112 = sphi 0, %s110
      %s113 = sphi 0, %s112
      %s127 = sphi 0, %s113
      %s131 = sphi 0, %s131
      %s133 = sphi 0, %s131
      %s134 = sphi 0, %s133
      %s148 = sphi 0, %s134
      %s152 = sphi 0, %s152
      %s154 = sphi 0, %s152
      %s155 = sphi 0, %s154
      %s169 = sphi 0, %s155
      %s173 = sphi 0, %s173
      %s175 = sphi 0, %s173
      %s176 = sphi 0, %s175
      %s190 = sphi 0, %s176
      %s194 = sphi 0, %s194
      %s196 = sphi 0, %s194
      %s197 = sphi 0, %s196
      %s211 = sphi 0, %s197
      %s215 = sphi 0, %s215
      %s217 = sphi 0, %s215
      %s218 = sphi 0, %s217
      %s232 = sphi 0, %s218
      %s236 = sphi 0, %s236
      %s238 = sphi 0, %s236
      %s239 = sphi 0, %s238
      %s253 = sphi 0, %s239
      %s257 = sphi 0, %s257
      %s259 = sphi 0, %s257
      %s260 = sphi 0, %s259
      %s274 = sphi 0, %s260
      %s280 = sphi 0, %s282
      %s283 = sphi 0, %s280
      %s284 = sphi 0, %s283
      %s300 = sphi 0, %s284
      %s306 = sphi 0, %s308
      %s309 = sphi 0, %s306
      %s310 = sphi 0, %s309
      %s326 = sphi 0, %s310
      %s332 = sphi 0, %s334
      %s335 = sphi 0, %s332
      %s336 = sphi 0, %s335
      %s352 = sphi 0, %s336
    $region4: #{tpu_custom_call.1} parent=1 // loop_header_branch
      %32 = sbr.rel (%p30) target = $region8
    $region5: #{tpu_custom_call.1} parent=1 // loop_body
      %s34 = ssub.s32 %s29, 1
      %s35 = ssub.s32 %s29, 2
      %s36 = sadd.s32 %s29, 1
      %s37 = ssub.s32 %s29, %s36
      %p38 = scmp.eq.s32.totalorder %s37, 0
      %s40 = sadd.s32 %s39, 1
      %s41 = scalar_select %p38, %s39, %s40
      %p44 = pneg %p38
      %p45 = scmp.eq.s32.totalorder %s29, 1
      %p46 = por %p44, %p45
      %p47 = scmp.ne.s32.totalorder %s39, %s42
      %p48 = scmp.eq.s32.totalorder %s29, 0
      %p49 = por %p47, %p48
      %p50 = scmp.ne.s32.totalorder %s39, %s42
      %p51 = scmp.eq.s32.totalorder %s34, 1
      %p52 = por %p50, %p51
      %p53 = scmp.ne.s32.totalorder %s42, %s43
      %p54 = scmp.eq.s32.totalorder %s34, 0
      %p55 = por %p53, %p54
      %p56 = scmp.ne.s32.totalorder %s42, %s43
      %p57 = scmp.eq.s32.totalorder %s35, 1
      %p58 = por %p56, %p57
      %p60 = scmp.ne.s32.totalorder %s43, %s59
      %p61 = scmp.eq.s32.totalorder %s35, 0
      %p62 = por %p60, %p61
      %s63 = ssub.s32 %s29, %s36
      %p64 = scmp.eq.s32.totalorder %s63, 0
      %s66 = sadd.s32 %s65, 1
      %s67 = scalar_select %p64, %s65, %s66
      %p70 = pneg %p64
      %p71 = scmp.eq.s32.totalorder %s29, 1
      %p72 = por %p70, %p71
      %p73 = scmp.ne.s32.totalorder %s65, %s68
      %p74 = scmp.eq.s32.totalorder %s29, 0
      %p75 = por %p73, %p74
      %p76 = scmp.ne.s32.totalorder %s65, %s68
      %p77 = scmp.eq.s32.totalorder %s34, 1
      %p78 = por %p76, %p77
      %p79 = scmp.ne.s32.totalorder %s68, %s69
      %p80 = scmp.eq.s32.totalorder %s34, 0
      %p81 = por %p79, %p80
      %p82 = scmp.ne.s32.totalorder %s68, %s69
      %p83 = scmp.eq.s32.totalorder %s35, 1
      %p84 = por %p82, %p83
      %p86 = scmp.ne.s32.totalorder %s69, %s85
      %p87 = scmp.eq.s32.totalorder %s35, 0
      %p88 = por %p86, %p87
      %s90 = sadd.s32 %s89, 1
      %p93 = scmp.eq.s32.totalorder %s29, 1
      %p94 = scmp.ne.s32.totalorder %s89, %s91
      %p95 = scmp.eq.s32.totalorder %s29, 0
      %p96 = por %p94, %p95
      %p97 = scmp.ne.s32.totalorder %s89, %s91
      %p98 = scmp.eq.s32.totalorder %s34, 1
      %p99 = por %p97, %p98
      %p100 = scmp.ne.s32.totalorder %s91, %s92
      %p101 = scmp.eq.s32.totalorder %s34, 0
      %p102 = por %p100, %p101
      %p103 = scmp.ne.s32.totalorder %s91, %s92
      %p104 = scmp.eq.s32.totalorder %s35, 1
      %p105 = por %p103, %p104
      %p107 = scmp.ne.s32.totalorder %s92, %s106
      %p108 = scmp.eq.s32.totalorder %s35, 0
      %p109 = por %p107, %p108
      %s111 = sadd.s32 %s110, 1
      %p114 = scmp.eq.s32.totalorder %s29, 1
      %p115 = scmp.ne.s32.totalorder %s110, %s112
      %p116 = scmp.eq.s32.totalorder %s29, 0
      %p117 = por %p115, %p116
      %p118 = scmp.ne.s32.totalorder %s110, %s112
      %p119 = scmp.eq.s32.totalorder %s34, 1
      %p120 = por %p118, %p119
      %p121 = scmp.ne.s32.totalorder %s112, %s113
      %p122 = scmp.eq.s32.totalorder %s34, 0
      %p123 = por %p121, %p122
      %p124 = scmp.ne.s32.totalorder %s112, %s113
      %p125 = scmp.eq.s32.totalorder %s35, 1
      %p126 = por %p124, %p125
      %p128 = scmp.ne.s32.totalorder %s113, %s127
      %p129 = scmp.eq.s32.totalorder %s35, 0
      %p130 = por %p128, %p129
      %s132 = sadd.s32 %s131, 1
      %p135 = scmp.eq.s32.totalorder %s29, 1
      %p136 = scmp.ne.s32.totalorder %s131, %s133
      %p137 = scmp.eq.s32.totalorder %s29, 0
      %p138 = por %p136, %p137
      %p139 = scmp.ne.s32.totalorder %s131, %s133
      %p140 = scmp.eq.s32.totalorder %s34, 1
      %p141 = por %p139, %p140
      %p142 = scmp.ne.s32.totalorder %s133, %s134
      %p143 = scmp.eq.s32.totalorder %s34, 0
      %p144 = por %p142, %p143
      %p145 = scmp.ne.s32.totalorder %s133, %s134
      %p146 = scmp.eq.s32.totalorder %s35, 1
      %p147 = por %p145, %p146
      %p149 = scmp.ne.s32.totalorder %s134, %s148
      %p150 = scmp.eq.s32.totalorder %s35, 0
      %p151 = por %p149, %p150
      %s153 = sadd.s32 %s152, 1
      %p156 = scmp.eq.s32.totalorder %s29, 1
      %p157 = scmp.ne.s32.totalorder %s152, %s154
      %p158 = scmp.eq.s32.totalorder %s29, 0
      %p159 = por %p157, %p158
      %p160 = scmp.ne.s32.totalorder %s152, %s154
      %p161 = scmp.eq.s32.totalorder %s34, 1
      %p162 = por %p160, %p161
      %p163 = scmp.ne.s32.totalorder %s154, %s155
      %p164 = scmp.eq.s32.totalorder %s34, 0
      %p165 = por %p163, %p164
      %p166 = scmp.ne.s32.totalorder %s154, %s155
      %p167 = scmp.eq.s32.totalorder %s35, 1
      %p168 = por %p166, %p167
      %p170 = scmp.ne.s32.totalorder %s155, %s169
      %p171 = scmp.eq.s32.totalorder %s35, 0
      %p172 = por %p170, %p171
      %s174 = sadd.s32 %s173, 1
      %p177 = scmp.eq.s32.totalorder %s29, 1
      %p178 = scmp.ne.s32.totalorder %s173, %s175
      %p179 = scmp.eq.s32.totalorder %s29, 0
      %p180 = por %p178, %p179
      %p181 = scmp.ne.s32.totalorder %s173, %s175
      %p182 = scmp.eq.s32.totalorder %s34, 1
      %p183 = por %p181, %p182
      %p184 = scmp.ne.s32.totalorder %s175, %s176
      %p185 = scmp.eq.s32.totalorder %s34, 0
      %p186 = por %p184, %p185
      %p187 = scmp.ne.s32.totalorder %s175, %s176
      %p188 = scmp.eq.s32.totalorder %s35, 1
      %p189 = por %p187, %p188
      %p191 = scmp.ne.s32.totalorder %s176, %s190
      %p192 = scmp.eq.s32.totalorder %s35, 0
      %p193 = por %p191, %p192
      %s195 = sadd.s32 %s194, 1
      %p198 = scmp.eq.s32.totalorder %s29, 1
      %p199 = scmp.ne.s32.totalorder %s194, %s196
      %p200 = scmp.eq.s32.totalorder %s29, 0
      %p201 = por %p199, %p200
      %p202 = scmp.ne.s32.totalorder %s194, %s196
      %p203 = scmp.eq.s32.totalorder %s34, 1
      %p204 = por %p202, %p203
      %p205 = scmp.ne.s32.totalorder %s196, %s197
      %p206 = scmp.eq.s32.totalorder %s34, 0
      %p207 = por %p205, %p206
      %p208 = scmp.ne.s32.totalorder %s196, %s197
      %p209 = scmp.eq.s32.totalorder %s35, 1
      %p210 = por %p208, %p209
      %p212 = scmp.ne.s32.totalorder %s197, %s211
      %p213 = scmp.eq.s32.totalorder %s35, 0
      %p214 = por %p212, %p213
      %s216 = sadd.s32 %s215, 1
      %p219 = scmp.eq.s32.totalorder %s29, 1
      %p220 = scmp.ne.s32.totalorder %s215, %s217
      %p221 = scmp.eq.s32.totalorder %s29, 0
      %p222 = por %p220, %p221
      %p223 = scmp.ne.s32.totalorder %s215, %s217
      %p224 = scmp.eq.s32.totalorder %s34, 1
      %p225 = por %p223, %p224
      %p226 = scmp.ne.s32.totalorder %s217, %s218
      %p227 = scmp.eq.s32.totalorder %s34, 0
      %p228 = por %p226, %p227
      %p229 = scmp.ne.s32.totalorder %s217, %s218
      %p230 = scmp.eq.s32.totalorder %s35, 1
      %p231 = por %p229, %p230
      %p233 = scmp.ne.s32.totalorder %s218, %s232
      %p234 = scmp.eq.s32.totalorder %s35, 0
      %p235 = por %p233, %p234
      %s237 = sadd.s32 %s236, 1
      %p240 = scmp.eq.s32.totalorder %s29, 1
      %p241 = scmp.ne.s32.totalorder %s236, %s238
      %p242 = scmp.eq.s32.totalorder %s29, 0
      %p243 = por %p241, %p242
      %p244 = scmp.ne.s32.totalorder %s236, %s238
      %p245 = scmp.eq.s32.totalorder %s34, 1
      %p246 = por %p244, %p245
      %p247 = scmp.ne.s32.totalorder %s238, %s239
      %p248 = scmp.eq.s32.totalorder %s34, 0
      %p249 = por %p247, %p248
      %p250 = scmp.ne.s32.totalorder %s238, %s239
      %p251 = scmp.eq.s32.totalorder %s35, 1
      %p252 = por %p250, %p251
      %p254 = scmp.ne.s32.totalorder %s239, %s253
      %p255 = scmp.eq.s32.totalorder %s35, 0
      %p256 = por %p254, %p255
      %s258 = sadd.s32 %s257, 1
      %p261 = scmp.eq.s32.totalorder %s29, 1
      %p262 = scmp.ne.s32.totalorder %s257, %s259
      %p263 = scmp.eq.s32.totalorder %s29, 0
      %p264 = por %p262, %p263
      %p265 = scmp.ne.s32.totalorder %s257, %s259
      %p266 = scmp.eq.s32.totalorder %s34, 1
      %p267 = por %p265, %p266
      %p268 = scmp.ne.s32.totalorder %s259, %s260
      %p269 = scmp.eq.s32.totalorder %s34, 0
      %p270 = por %p268, %p269
      %p271 = scmp.ne.s32.totalorder %s259, %s260
      %p272 = scmp.eq.s32.totalorder %s35, 1
      %p273 = por %p271, %p272
      %p275 = scmp.ne.s32.totalorder %s260, %s274
      %p276 = scmp.eq.s32.totalorder %s35, 0
      %p277 = por %p275, %p276
      %s278 = ssub.s32 %s29, %s36
      %p279 = scmp.eq.s32.totalorder %s278, 0
      %s281 = sadd.s32 %s280, 1
      %s282 = scalar_select %p279, %s280, %s281
      %p285 = pneg %p279
      %p286 = scmp.eq.s32.totalorder %s29, 1
      %p287 = por %p285, %p286
      %p288 = scmp.ne.s32.totalorder %s280, %s283
      %p289 = scmp.eq.s32.totalorder %s29, 0
      %p290 = por %p288, %p289
      %p291 = scmp.ne.s32.totalorder %s280, %s283
      %p292 = scmp.eq.s32.totalorder %s34, 1
      %p293 = por %p291, %p292
      %p294 = scmp.ne.s32.totalorder %s283, %s284
      %p295 = scmp.eq.s32.totalorder %s34, 0
      %p296 = por %p294, %p295
      %p297 = scmp.ne.s32.totalorder %s283, %s284
      %p298 = scmp.eq.s32.totalorder %s35, 1
      %p299 = por %p297, %p298
      %p301 = scmp.ne.s32.totalorder %s284, %s300
      %p302 = scmp.eq.s32.totalorder %s35, 0
      %p303 = por %p301, %p302
      %s304 = ssub.s32 %s29, %s36
      %p305 = scmp.eq.s32.totalorder %s304, 0
      %s307 = sadd.s32 %s306, 1
      %s308 = scalar_select %p305, %s306, %s307
      %p311 = pneg %p305
      %p312 = scmp.eq.s32.totalorder %s29, 1
      %p313 = por %p311, %p312
      %p314 = scmp.ne.s32.totalorder %s306, %s309
      %p315 = scmp.eq.s32.totalorder %s29, 0
      %p316 = por %p314, %p315
      %p317 = scmp.ne.s32.totalorder %s306, %s309
      %p318 = scmp.eq.s32.totalorder %s34, 1
      %p319 = por %p317, %p318
      %p320 = scmp.ne.s32.totalorder %s309, %s310
      %p321 = scmp.eq.s32.totalorder %s34, 0
      %p322 = por %p320, %p321
      %p323 = scmp.ne.s32.totalorder %s309, %s310
      %p324 = scmp.eq.s32.totalorder %s35, 1
      %p325 = por %p323, %p324
      %p327 = scmp.ne.s32.totalorder %s310, %s326
      %p328 = scmp.eq.s32.totalorder %s35, 0
      %p329 = por %p327, %p328
      %s330 = ssub.s32 %s29, %s36
      %p331 = scmp.eq.s32.totalorder %s330, 0
      %s333 = sadd.s32 %s332, 1
      %s334 = scalar_select %p331, %s332, %s333
      %p337 = pneg %p331
      %p338 = scmp.eq.s32.totalorder %s29, 1
      %p339 = por %p337, %p338
      %p340 = scmp.ne.s32.totalorder %s332, %s335
      %p341 = scmp.eq.s32.totalorder %s29, 0
      %p342 = por %p340, %p341
      %p343 = scmp.ne.s32.totalorder %s332, %s335
      %p344 = scmp.eq.s32.totalorder %s34, 1
      %p345 = por %p343, %p344
      %p346 = scmp.ne.s32.totalorder %s335, %s336
      %p347 = scmp.eq.s32.totalorder %s34, 0
      %p348 = por %p346, %p347
      %p349 = scmp.ne.s32.totalorder %s335, %s336
      %p350 = scmp.eq.s32.totalorder %s35, 1
      %p351 = por %p349, %p350
      %p353 = scmp.ne.s32.totalorder %s336, %s352
      %p354 = scmp.eq.s32.totalorder %s35, 0
      %p355 = por %p353, %p354
      %p356 = scmp.le.s32.totalorder 1, %s29
      %p357 = scmp.lt.s32.totalorder %s29, 3
      %p358 = pnand %p356, %p357
      %p359 = pneg %p358
      // Predicated region
      $region9: #{tpu_custom_call.1} parent=5 // pred_check
        _
      $region10: #{tpu_custom_call.1} parent=5 // pred_check_branch
        %361 = sbr.rel (%p358) target = $region12
      $region11: #{tpu_custom_call.1} parent=5 // pred_region
        %s362 = ssub.s32 %s29, 1
        // Predicated region
        $region13: #{tpu_custom_call.1} parent=11 // pred_check
          %p363 = pneg %p102
        $region14: #{tpu_custom_call.1} parent=11 // pred_check_branch
          %365 = sbr.rel (%p363) target = $region16
        $region15: #{tpu_custom_call.1} parent=11 // pred_region
          %s367 = ssub.s32 256, 256
          %368 = vsyncadd [#allocation4], %s367
          %s369 = sshll.u32 [#allocation3], 4
          %s370 = int_to_ptr.vmem [resolvable:$true] %s369
          %375 = dma.hbm_to_vmem [thread:$0]  %s2, 256, %s370, [#allocation4], 128, 128, 8
        $region16: #{tpu_custom_call.1} parent=11 // pred_fallthru
          _
        // Predicated region
        $region17: #{tpu_custom_call.1} parent=11 // pred_check
          %p376 = pneg %p123
        $region18: #{tpu_custom_call.1} parent=11 // pred_check_branch
          %378 = sbr.rel (%p376) target = $region20
        $region19: #{tpu_custom_call.1} parent=11 // pred_region
          _
        $region20: #{tpu_custom_call.1} parent=11 // pred_fallthru
          _
        // Predicated region
        $region21: #{tpu_custom_call.1} parent=11 // pred_check
          %p379 = pneg %p144
        $region22: #{tpu_custom_call.1} parent=11 // pred_check_branch
          %381 = sbr.rel (%p379) target = $region24
        $region23: #{tpu_custom_call.1} parent=11 // pred_region
          %s383 = ssub.s32 16, 16
          %384 = vsyncadd [#allocation7], %s383
          %s386 = sshll.u32 [#allocation6], 4
          %s387 = int_to_ptr.vmem [resolvable:$true] %s386
          %389 = dma.hbm_to_vmem [thread:$0]  %s4, 16, %s387, [#allocation7]
        $region24: #{tpu_custom_call.1} parent=11 // pred_fallthru
          _
        // Predicated region
        $region25: #{tpu_custom_call.1} parent=11 // pred_check
          %p390 = pneg %p165
        $region26: #{tpu_custom_call.1} parent=11 // pred_check_branch
          %392 = sbr.rel (%p390) target = $region28
        $region27: #{tpu_custom_call.1} parent=11 // pred_region
          %s394 = ssub.s32 10240, 10240
          %395 = vsyncadd [#allocation7], %s394
          %s396 = sshll.u32 [#allocation8], 4
          %s397 = int_to_ptr.vmem [resolvable:$true] %s396
          %402 = dma.hbm_to_vmem [thread:$0]  %s5, 10240, %s397, [#allocation7], 64, 64, 4
        $region28: #{tpu_custom_call.1} parent=11 // pred_fallthru
          _
        // Predicated region
        $region29: #{tpu_custom_call.1} parent=11 // pred_check
          %p403 = pneg %p186
        $region30: #{tpu_custom_call.1} parent=11 // pred_check_branch
          %405 = sbr.rel (%p403) target = $region32
        $region31: #{tpu_custom_call.1} parent=11 // pred_region
          _
        $region32: #{tpu_custom_call.1} parent=11 // pred_fallthru
          _
        // Predicated region
        $region33: #{tpu_custom_call.1} parent=11 // pred_check
          %p406 = pneg %p207
        $region34: #{tpu_custom_call.1} parent=11 // pred_check_branch
          %408 = sbr.rel (%p406) target = $region36
        $region35: #{tpu_custom_call.1} parent=11 // pred_region
          _
        $region36: #{tpu_custom_call.1} parent=11 // pred_fallthru
          _
        // Predicated region
        $region37: #{tpu_custom_call.1} parent=11 // pred_check
          %p409 = pneg %p228
        $region38: #{tpu_custom_call.1} parent=11 // pred_check_branch
          %411 = sbr.rel (%p409) target = $region40
        $region39: #{tpu_custom_call.1} parent=11 // pred_region
          _
        $region40: #{tpu_custom_call.1} parent=11 // pred_fallthru
          _
        // Predicated region
        $region41: #{tpu_custom_call.1} parent=11 // pred_check
          %p412 = pneg %p249
        $region42: #{tpu_custom_call.1} parent=11 // pred_check_branch
          %414 = sbr.rel (%p412) target = $region44
        $region43: #{tpu_custom_call.1} parent=11 // pred_region
          %s416 = ssub.s32 2048, 2048
          %417 = vsyncadd [#allocation10], %s416
          %s418 = sshll.u32 [#allocation9], 4
          %s419 = int_to_ptr.vmem [resolvable:$true] %s418
          %424 = dma.hbm_to_vmem [thread:$0]  %s9, 2048, %s419, [#allocation10], 128, 128, 8
        $region44: #{tpu_custom_call.1} parent=11 // pred_fallthru
          _
        // Predicated region
        $region45: #{tpu_custom_call.1} parent=11 // pred_check
          %p425 = pneg %p270
        $region46: #{tpu_custom_call.1} parent=11 // pred_check_branch
          %427 = sbr.rel (%p425) target = $region48
        $region47: #{tpu_custom_call.1} parent=11 // pred_region
          _
        $region48: #{tpu_custom_call.1} parent=11 // pred_fallthru
          _
      $region12: #{tpu_custom_call.1} parent=5 // pred_fallthru
        _
      %p428 = scmp.lt.s32.totalorder %s29, 2
      // Predicated region
      $region49: #{tpu_custom_call.1} parent=5 // pred_check
        %p429 = pneg %p428
      $region50: #{tpu_custom_call.1} parent=5 // pred_check_branch
        %431 = sbr.rel (%p429) target = $region52
      $region51: #{tpu_custom_call.1} parent=5 // pred_region
        // Predicated region
        $region53: #{tpu_custom_call.1} parent=51 // pred_check
          %p432 = pneg %p49
        $region54: #{tpu_custom_call.1} parent=51 // pred_check_branch
          %434 = sbr.rel (%p432) target = $region56
        $region55: #{tpu_custom_call.1} parent=51 // pred_region
          %p435 = scmp.lt.s32.totalorder %s29, 1
          %s436 = scalar_select %p435, %s29, 1
          %s437 = smul.addr %s436, 2
          %s438 = smul.addr %s437, 8
          %s439 = scalar_lea.vmem %s0, %s438
        $region56: #{tpu_custom_call.1} parent=51 // pred_fallthru
          _
        // Predicated region
        $region57: #{tpu_custom_call.1} parent=51 // pred_check
          %p440 = pneg %p75
        $region58: #{tpu_custom_call.1} parent=51 // pred_check_branch
          %442 = sbr.rel (%p440) target = $region60
        $region59: #{tpu_custom_call.1} parent=51 // pred_region
          %p443 = scmp.lt.s32.totalorder %s29, 1
          %s444 = scalar_select %p443, %s29, 1
          %s445 = smul.addr %s444, 2
          %s446 = smul.addr %s445, 8
          %s447 = scalar_lea.vmem %s1, %s446
        $region60: #{tpu_custom_call.1} parent=51 // pred_fallthru
          _
      $region52: #{tpu_custom_call.1} parent=5 // pred_fallthru
        _
      %p448 = scmp.le.s32.totalorder 1, %s29
      %p449 = scmp.lt.s32.totalorder %s29, 3
      %p450 = pnand %p448, %p449
      %p451 = pneg %p450
      // Predicated region
      $region61: #{tpu_custom_call.1} parent=5 // pred_check
        _
      $region62: #{tpu_custom_call.1} parent=5 // pred_check_branch
        %453 = sbr.rel (%p450) target = $region64
      $region63: #{tpu_custom_call.1} parent=5 // pred_region
        %s454 = ssub.s32 %s29, 1
        // Predicated region
        $region65: #{tpu_custom_call.1} parent=63 // pred_check
          %p455 = pneg %p102
        $region66: #{tpu_custom_call.1} parent=63 // pred_check_branch
          %457 = sbr.rel (%p455) target = $region68
        $region67: #{tpu_custom_call.1} parent=63 // pred_region
          %458 = dma.done [#allocation4], 256
        $region68: #{tpu_custom_call.1} parent=63 // pred_fallthru
          _
        // Predicated region
        $region69: #{tpu_custom_call.1} parent=63 // pred_check
          %p459 = pneg %p144
        $region70: #{tpu_custom_call.1} parent=63 // pred_check_branch
          %461 = sbr.rel (%p459) target = $region72
        $region71: #{tpu_custom_call.1} parent=63 // pred_region
          %462 = dma.done [#allocation7], 16
        $region72: #{tpu_custom_call.1} parent=63 // pred_fallthru
          _
        // Predicated region
        $region73: #{tpu_custom_call.1} parent=63 // pred_check
          %p463 = pneg %p165
        $region74: #{tpu_custom_call.1} parent=63 // pred_check_branch
          %465 = sbr.rel (%p463) target = $region76
        $region75: #{tpu_custom_call.1} parent=63 // pred_region
          %466 = dma.done [#allocation7], 10240
        $region76: #{tpu_custom_call.1} parent=63 // pred_fallthru
          _
        // Predicated region
        $region77: #{tpu_custom_call.1} parent=63 // pred_check
          %p467 = pneg %p249
        $region78: #{tpu_custom_call.1} parent=63 // pred_check_branch
          %469 = sbr.rel (%p467) target = $region80
        $region79: #{tpu_custom_call.1} parent=63 // pred_region
          %470 = dma.done [#allocation10], 2048
        $region80: #{tpu_custom_call.1} parent=63 // pred_fallthru
          _
        %p471 = scmp.lt.s32.totalorder %s34, 1
        %s472 = scalar_select %p471, %s34, 1
        %s473 = smul.addr %s472, 2
        %s474 = smul.addr %s473, 8
        %s475 = scalar_lea.vmem %s0, %s474
        %p476 = pneg %p55
        %p477 = pneg %p52
        %p478 = scmp.lt.s32.totalorder %s34, 1
        %s479 = scalar_select %p478, %s34, 1
        %s480 = smul.addr %s479, 2
        %s481 = smul.addr %s480, 8
        %s482 = scalar_lea.vmem %s1, %s481
        %p483 = pneg %p81
        %p484 = pneg %p78
        %p485 = pneg %p102
        %p486 = pneg %p99
        %p487 = pneg %p123
        %p488 = pneg %p120
        %p489 = pneg %p144
        %p490 = pneg %p141
        %p491 = pneg %p165
        %p492 = pneg %p162
        %p493 = pneg %p186
        %p494 = pneg %p183
        %p495 = pneg %p207
        %p496 = pneg %p204
        %p497 = pneg %p228
        %p498 = pneg %p225
        %p499 = pneg %p249
        %p500 = pneg %p246
        %p501 = pneg %p270
        %p502 = pneg %p267
        %p503 = pneg %p296
        %p504 = pneg %p293
        %s505 = sand.u32 %s283, 1
        %s506 = scalar_lea.sflag [#allocation5], %s505
        %s507 = sand.u32 %s283, 1
        %s508 = smul.addr %s507, 16
        %s509 = scalar_lea.vmem [#allocation11], %s508
        %p510 = pneg %p322
        %p511 = pneg %p319
        %s512 = sand.u32 %s34, 1
        %s513 = scalar_lea.sflag [#allocation13], %s512
        %s514 = sand.u32 %s309, 1
        %s515 = smul.addr %s514, 16
        %s516 = scalar_lea.vmem [#allocation12], %s515
        %p517 = pneg %p348
        %p518 = pneg %p345
        %s519 = sand.u32 %s34, 1
        %s520 = scalar_lea.sflag [#allocation13], %s519
        %s521 = sand.u32 %s335, 1
        %s522 = smul.addr %s521, 16
        %s523 = scalar_lea.vmem [#allocation14], %s522
        %p524 = scmp.lt.s32.totalorder %s34, 1
        %s525 = scalar_select %p524, %s34, 1
        %s526 = smul.addr %s525, 2
        %s527 = smul.addr %s526, 8
        %s528 = scalar_lea.vmem %s0, %s527
        %p529 = scmp.lt.s32.totalorder %s34, 1
        %s530 = scalar_select %p529, %s34, 1
        %s531 = smul.addr %s530, 2
        %s532 = smul.addr %s531, 8
        %s533 = scalar_lea.vmem %s1, %s532
        %p535 = scmp.eq.s32.totalorder %s34, 0
        // Predicated region
        $region81: #{tpu_custom_call.1} parent=63 // pred_check
          %p536 = pneg %p535
        $region82: #{tpu_custom_call.1} parent=63 // pred_check_branch
          %538 = sbr.rel (%p536) target = $region84
        $region83: #{tpu_custom_call.1} parent=63 // pred_region
          %539 = vst [vmem:[#allocation2 + $0x4] sm:$0x8] 0
          %540 = vst [vmem:[#allocation2 + $0x10] sm:$0x1] 0
        $region84: #{tpu_custom_call.1} parent=63 // pred_fallthru
          _
        %v541 = vld [vmem:[%s528] sm:$0xff]
        %v542 = vld [vmem:[%s528 + $0x8] sm:$0xff]
        %v543 = vld [vmem:[%s533] sm:$0xff]
        %v544 = vld [vmem:[%s533 + $0x8] sm:$0xff]
        %546 = vset.pattern.permute.xlu0 0
        %547 = vperm.xlu0 %546, %v543
        %v548 = vpop.permute.xlu0 %547
        %551 = vset.pattern.permute.xlu0 0
        %552 = vperm.xlu0 %551, %v544
        %v553 = vpop.permute.xlu0 %552
        %v555 = vld [vmem:[#allocation3] sm:$0xff]
        %v556 = vld [vmem:[#allocation3 + $0x8] sm:$0xff]
        %v557 = vadd.f32 %v541, %v555
        %v558 = vadd.f32 %v542, %v556
        %v559 = vld [vmem:[%s3] sm:$0x1]
        %v560 = vld [vmem:[#allocation6] sm:$0x1]
        %561 = vadd.xlane.f32.xlu0 %v557
        %v562 = vpop.xlane.xlu0 %561
        %563 = vadd.xlane.f32.xlu0 %v558
        %v564 = vpop.xlane.xlu0 %563
        %v565 = vmul.f32 %v562, 0.03125
        %v566 = vmul.f32 %v564, 0.03125
        %v567 = vmul.f32 %v557, %v557
        %v568 = vmul.f32 %v558, %v558
        %569 = vadd.xlane.f32.xlu0 %v567
        %v570 = vpop.xlane.xlu0 %569
        %571 = vadd.xlane.f32.xlu0 %v568
        %v572 = vpop.xlane.xlu0 %571
        %v573 = vmul.f32 %v570, 0.03125
        %v574 = vmul.f32 %v572, 0.03125
        %v575 = vmul.f32 %v565, %v565
        %v576 = vmul.f32 %v566, %v566
        %v577 = vsub.f32 %v573, %v575
        %v578 = vsub.f32 %v574, %v576
        %v579 = vsub.f32 %v557, %v565
        %v580 = vsub.f32 %v558, %v566
        %v581 = vadd.f32 %v577, 1e-05
        %v582 = vadd.f32 %v578, 1e-05
        %v583 = vrsqrt.pop %v581
        %v584 = vrsqrt.pop %v582
        %v585 = vmul.f32 %v579, %v583
        %v586 = vmul.f32 %v580, %v584
        %v588 = vlaneseq
        %v589 = vshrl.u32 %v588, 7
        %v590 = vsub.s32 0, %v589
        %v591 = vrot.slane %v559, %v590
        %v593 = vmul.f32 %v585, %v591
        %v594 = vmul.f32 %v586, %v591
        %v596 = vlaneseq
        %v597 = vshrl.u32 %v596, 7
        %v598 = vsub.s32 0, %v597
        %v599 = vrot.slane %v560, %v598
        %v601 = vadd.f32 %v593, %v599
        %v602 = vadd.f32 %v594, %v599
        %v603 = vmul.f32 %v601, %v548
        %v604 = vmul.f32 %v602, %v553
        %v605 = vpack.c.bf16 %v604, %v603
        %v607 = vunpack.c.l.b16 %v605
        %v608 = vunpack.c.h.b16 %v605
        %v609 = vpack.c.b16 %v607, %v607
        %v610 = vpack.c.b16 %v608, %v608
        %613 = vst [vmem:[#allocation2 + $0x8] sm:$0xf] %v609
        %614 = vst [vmem:[#allocation2 + $0xc] sm:$0xf] %v610
        %v615 = vld [vmem:[#allocation2 + $0x4] sm:$0x8]
        %v616 = vld [vmem:[#allocation2 + $0x8] sm:$0xf]
        %v617 = vld [vmem:[#allocation2 + $0xc] sm:$0x7]
        %v618 = vld [vmem:[#allocation8] sm:$0xf]
        %v619 = vld [vmem:[#allocation8 + $0x4] sm:$0xf]
        %v620 = vld [vmem:[#allocation8 + $0x8] sm:$0xf]
        %v621 = vld [vmem:[#allocation8 + $0xc] sm:$0xf]
        %v622 = vld [vmem:[#allocation8 + $0x10] sm:$0xf]
        %v623 = vld [vmem:[#allocation8 + $0x14] sm:$0xf]
        %v624 = vld [vmem:[#allocation8 + $0x18] sm:$0xf]
        %v625 = vld [vmem:[#allocation8 + $0x1c] sm:$0xf]
        %v626 = vld [vmem:[#allocation8 + $0x20] sm:$0xf]
        %v627 = vld [vmem:[#allocation8 + $0x24] sm:$0xf]
        %v628 = vld [vmem:[#allocation8 + $0x28] sm:$0xf]
        %v629 = vld [vmem:[#allocation8 + $0x2c] sm:$0xf]
        %v630 = vld [vmem:[#allocation8 + $0x30] sm:$0xf]
        %v631 = vld [vmem:[#allocation8 + $0x34] sm:$0xf]
        %v632 = vld [vmem:[#allocation8 + $0x38] sm:$0xf]
        %v633 = vld [vmem:[#allocation8 + $0x3c] sm:$0xf]
        %v634 = vld [vmem:[#allocation2 + $0xc] sm:$0xf]
        %s635 = scalar_lea.vmem [#allocation8], 64
        %v636 = vld [vmem:[%s635] sm:$0xf]
        %v637 = vld [vmem:[%s635 + $0x4] sm:$0xf]
        %v638 = vld [vmem:[%s635 + $0x8] sm:$0xf]
        %v639 = vld [vmem:[%s635 + $0xc] sm:$0xf]
        %v640 = vld [vmem:[%s635 + $0x10] sm:$0xf]
        %v641 = vld [vmem:[%s635 + $0x14] sm:$0xf]
        %v642 = vld [vmem:[%s635 + $0x18] sm:$0xf]
        %v643 = vld [vmem:[%s635 + $0x1c] sm:$0xf]
        %v644 = vld [vmem:[%s635 + $0x20] sm:$0xf]
        %v645 = vld [vmem:[%s635 + $0x24] sm:$0xf]
        %v646 = vld [vmem:[%s635 + $0x28] sm:$0xf]
        %v647 = vld [vmem:[%s635 + $0x2c] sm:$0xf]
        %v648 = vld [vmem:[%s635 + $0x30] sm:$0xf]
        %v649 = vld [vmem:[%s635 + $0x34] sm:$0xf]
        %v650 = vld [vmem:[%s635 + $0x38] sm:$0xf]
        %v651 = vld [vmem:[%s635 + $0x3c] sm:$0xf]
        %v655 = vunpack.c.l.b16 %v615
        %v656 = vunpack.c.l.b16 %v616
        %v657 = vunpack.c.l.b16 %v634
        %v658 = vpack.c.b16 %v656, %v655
        %v659 = vpack.c.b16 %v657, %v657
        %vm660 = vsmask.f32 4352
        %v662 = vshrl.u32 %v658, 16
        %v664 = vrot.slane %v662, 3
        %v665 = vshll.u32 %v658, 16
        %v667 = vrot.slane %v665, 4
        %v668 = vor.u32 %v664, %v667
        %v670 = vshrl.u32 %v659, 16
        %v672 = vrot.slane %v670, 3
        %v673 = vshll.u32 %v659, 16
        %v675 = vrot.slane %v673, 4
        %v676 = vor.u32 %v672, %v675
        %v677 = vsel %vm660, %v668, %v676
        %v695 = vunpack.c.l.b16 %v636
        %v696 = vunpack.c.l.b16 %v637
        %v697 = vunpack.c.l.b16 %v638
        %v698 = vunpack.c.l.b16 %v639
        %v699 = vunpack.c.l.b16 %v640
        %v700 = vunpack.c.l.b16 %v641
        %v701 = vunpack.c.l.b16 %v642
        %v702 = vunpack.c.l.b16 %v643
        %v703 = vunpack.c.l.b16 %v644
        %v704 = vunpack.c.l.b16 %v645
        %v705 = vunpack.c.l.b16 %v646
        %v706 = vunpack.c.l.b16 %v647
        %v707 = vunpack.c.l.b16 %v648
        %v708 = vunpack.c.l.b16 %v649
        %v709 = vunpack.c.l.b16 %v650
        %v710 = vunpack.c.l.b16 %v651
        %v711 = vpack.c.b16 %v696, %v695
        %v712 = vpack.c.b16 %v698, %v697
        %v713 = vpack.c.b16 %v700, %v699
        %v714 = vpack.c.b16 %v702, %v701
        %v715 = vpack.c.b16 %v704, %v703
        %v716 = vpack.c.b16 %v706, %v705
        %v717 = vpack.c.b16 %v708, %v707
        %v718 = vpack.c.b16 %v710, %v709
        %727 = vmatprep.subr.bf16.mxu0 0
        %728 = vmatpush1.bf16.msra.mxu0 %v718
        %729 = vmatprep.subr.bf16.mxu0 0
        %730 = vmatpush1.bf16.msra.mxu0 %v717
        %731 = vmatprep.subr.bf16.mxu0 0
        %732 = vmatpush1.bf16.msra.mxu0 %v716
        %733 = vmatprep.subr.bf16.mxu0 0
        %734 = vmatpush1.bf16.msra.mxu0 %v715
        %735 = vmatprep.subr.bf16.mxu0 0
        %736 = vmatpush1.bf16.msra.mxu0 %v714
        %737 = vmatprep.subr.bf16.mxu0 0
        %738 = vmatpush1.bf16.msra.mxu0 %v713
        %739 = vmatprep.subr.bf16.mxu0 0
        %740 = vmatpush1.bf16.msra.mxu0 %v712
        %741 = vmatprep.subr.bf16.mxu0 0
        %742 = vmatpush1.bf16.msra.mxu0 %v711
        %743 = vmatprep.subr.bf16.mxu0 0
        %744 = vmatpush2.bf16.msra.mxu0 0
        %745 = vmatprep.subr.bf16.mxu0 0
        %746 = vmatpush2.bf16.msra.mxu0 0
        %747 = vmatprep.subr.bf16.mxu0 0
        %748 = vmatpush2.bf16.msra.mxu0 0
        %749 = vmatprep.subr.bf16.mxu0 0
        %750 = vmatpush2.bf16.msra.mxu0 0
        %751 = vmatprep.subr.bf16.mxu0 0
        %752 = vmatpush2.bf16.msra.mxu0 0
        %753 = vmatprep.subr.bf16.mxu0 0
        %754 = vmatpush2.bf16.msra.mxu0 0
        %755 = vmatprep.subr.bf16.mxu0 0
        %756 = vmatpush2.bf16.msra.mxu0 0
        %757 = vmatprep.subr.bf16.mxu0 0
        %758 = vmatpush2.bf16.msra.mxu0 0
        %759 = vmatprep.mubr.bf16.mxu0 0
        %760 = vmatmul.mubr.bf16.gmra.mxu0 %v677
        %v761 = vpop.f32.mrf.mxu0
        %v762 = vadd.f32 0.0, %v761
        %v763 = vpop.f32.mrf.mxu0
        %v764 = vpop.f32.mrf.mxu0
        %v765 = vadd.f32 0.0, %v764
        %v766 = vpop.f32.mrf.mxu0
        %767 = vdwg.mxu0
        %v769 = vunpack.c.l.b16 %v617
        %v770 = vpack.c.b16 %v769, %v769
        %vm771 = vcmask 1044480
        %v772 = vrot.slane %v658, 3
        %v773 = vrot.slane %v770, 3
        %v774 = vsel %vm771, %v772, %v773
        %v792 = vunpack.c.l.b16 %v618
        %v793 = vunpack.c.l.b16 %v619
        %v794 = vunpack.c.l.b16 %v620
        %v795 = vunpack.c.l.b16 %v621
        %v796 = vunpack.c.l.b16 %v622
        %v797 = vunpack.c.l.b16 %v623
        %v798 = vunpack.c.l.b16 %v624
        %v799 = vunpack.c.l.b16 %v625
        %v800 = vunpack.c.l.b16 %v626
        %v801 = vunpack.c.l.b16 %v627
        %v802 = vunpack.c.l.b16 %v628
        %v803 = vunpack.c.l.b16 %v629
        %v804 = vunpack.c.l.b16 %v630
        %v805 = vunpack.c.l.b16 %v631
        %v806 = vunpack.c.l.b16 %v632
        %v807 = vunpack.c.l.b16 %v633
        %v808 = vpack.c.b16 %v793, %v792
        %v809 = vpack.c.b16 %v795, %v794
        %v810 = vpack.c.b16 %v797, %v796
        %v811 = vpack.c.b16 %v799, %v798
        %v812 = vpack.c.b16 %v801, %v800
        %v813 = vpack.c.b16 %v803, %v802
        %v814 = vpack.c.b16 %v805, %v804
        %v815 = vpack.c.b16 %v807, %v806
        %824 = vmatprep.subr.bf16.mxu0 0
        %825 = vmatpush1.bf16.msra.mxu0 %v815
        %826 = vmatprep.subr.bf16.mxu0 0
        %827 = vmatpush1.bf16.msra.mxu0 %v814
        %828 = vmatprep.subr.bf16.mxu0 0
        %829 = vmatpush1.bf16.msra.mxu0 %v813
        %830 = vmatprep.subr.bf16.mxu0 0
        %831 = vmatpush1.bf16.msra.mxu0 %v812
        %832 = vmatprep.subr.bf16.mxu0 0
        %833 = vmatpush1.bf16.msra.mxu0 %v811
        %834 = vmatprep.subr.bf16.mxu0 0
        %835 = vmatpush1.bf16.msra.mxu0 %v810
        %836 = vmatprep.subr.bf16.mxu0 0
        %837 = vmatpush1.bf16.msra.mxu0 %v809
        %838 = vmatprep.subr.bf16.mxu0 0
        %839 = vmatpush1.bf16.msra.mxu0 %v808
        %840 = vmatprep.subr.bf16.mxu0 0
        %841 = vmatpush2.bf16.msra.mxu0 0
        %842 = vmatprep.subr.bf16.mxu0 0
        %843 = vmatpush2.bf16.msra.mxu0 0
        %844 = vmatprep.subr.bf16.mxu0 0
        %845 = vmatpush2.bf16.msra.mxu0 0
        %846 = vmatprep.subr.bf16.mxu0 0
        %847 = vmatpush2.bf16.msra.mxu0 0
        %848 = vmatprep.subr.bf16.mxu0 0
        %849 = vmatpush2.bf16.msra.mxu0 0
        %850 = vmatprep.subr.bf16.mxu0 0
        %851 = vmatpush2.bf16.msra.mxu0 0
        %852 = vmatprep.subr.bf16.mxu0 0
        %853 = vmatpush2.bf16.msra.mxu0 0
        %854 = vmatprep.subr.bf16.mxu0 0
        %855 = vmatpush2.bf16.msra.mxu0 0
        %856 = vmatprep.mubr.bf16.mxu0 0
        %857 = vmatmul.mubr.bf16.gmra.mxu0 %v774
        %v858 = vpop.f32.mrf.mxu0
        %v859 = vadd.f32 %v762, %v858
        %v860 = vpop.f32.mrf.mxu0
        %v861 = vpop.f32.mrf.mxu0
        %v862 = vadd.f32 %v765, %v861
        %v863 = vpop.f32.mrf.mxu0
        %864 = vdwg.mxu0
        %s865 = scalar_lea.vmem [#allocation8], 128
        %v866 = vld [vmem:[%s865] sm:$0xf]
        %v867 = vld [vmem:[%s865 + $0x4] sm:$0xf]
        %v868 = vld [vmem:[%s865 + $0x8] sm:$0xf]
        %v869 = vld [vmem:[%s865 + $0xc] sm:$0xf]
        %v870 = vld [vmem:[%s865 + $0x10] sm:$0xf]
        %v871 = vld [vmem:[%s865 + $0x14] sm:$0xf]
        %v872 = vld [vmem:[%s865 + $0x18] sm:$0xf]
        %v873 = vld [vmem:[%s865 + $0x1c] sm:$0xf]
        %v874 = vld [vmem:[%s865 + $0x20] sm:$0xf]
        %v875 = vld [vmem:[%s865 + $0x24] sm:$0xf]
        %v876 = vld [vmem:[%s865 + $0x28] sm:$0xf]
        %v877 = vld [vmem:[%s865 + $0x2c] sm:$0xf]
        %v878 = vld [vmem:[%s865 + $0x30] sm:$0xf]
        %v879 = vld [vmem:[%s865 + $0x34] sm:$0xf]
        %v880 = vld [vmem:[%s865 + $0x38] sm:$0xf]
        %v881 = vld [vmem:[%s865 + $0x3c] sm:$0xf]
        %v882 = vpack.c.b16 %v657, %v656
        %v900 = vunpack.c.l.b16 %v866
        %v901 = vunpack.c.l.b16 %v867
        %v902 = vunpack.c.l.b16 %v868
        %v903 = vunpack.c.l.b16 %v869
        %v904 = vunpack.c.l.b16 %v870
        %v905 = vunpack.c.l.b16 %v871
        %v906 = vunpack.c.l.b16 %v872
        %v907 = vunpack.c.l.b16 %v873
        %v908 = vunpack.c.l.b16 %v874
        %v909 = vunpack.c.l.b16 %v875
        %v910 = vunpack.c.l.b16 %v876
        %v911 = vunpack.c.l.b16 %v877
        %v912 = vunpack.c.l.b16 %v878
        %v913 = vunpack.c.l.b16 %v879
        %v914 = vunpack.c.l.b16 %v880
        %v915 = vunpack.c.l.b16 %v881
        %v916 = vpack.c.b16 %v901, %v900
        %v917 = vpack.c.b16 %v903, %v902
        %v918 = vpack.c.b16 %v905, %v904
        %v919 = vpack.c.b16 %v907, %v906
        %v920 = vpack.c.b16 %v909, %v908
        %v921 = vpack.c.b16 %v911, %v910
        %v922 = vpack.c.b16 %v913, %v912
        %v923 = vpack.c.b16 %v915, %v914
        %932 = vmatprep.subr.bf16.mxu0 0
        %933 = vmatpush1.bf16.msra.mxu0 %v923
        %934 = vmatprep.subr.bf16.mxu0 0
        %935 = vmatpush1.bf16.msra.mxu0 %v922
        %936 = vmatprep.subr.bf16.mxu0 0
        %937 = vmatpush1.bf16.msra.mxu0 %v921
        %938 = vmatprep.subr.bf16.mxu0 0
        %939 = vmatpush1.bf16.msra.mxu0 %v920
        %940 = vmatprep.subr.bf16.mxu0 0
        %941 = vmatpush1.bf16.msra.mxu0 %v919
        %942 = vmatprep.subr.bf16.mxu0 0
        %943 = vmatpush1.bf16.msra.mxu0 %v918
        %944 = vmatprep.subr.bf16.mxu0 0
        %945 = vmatpush1.bf16.msra.mxu0 %v917
        %946 = vmatprep.subr.bf16.mxu0 0
        %947 = vmatpush1.bf16.msra.mxu0 %v916
        %948 = vmatprep.subr.bf16.mxu0 0
        %949 = vmatpush2.bf16.msra.mxu0 0
        %950 = vmatprep.subr.bf16.mxu0 0
        %951 = vmatpush2.bf16.msra.mxu0 0
        %952 = vmatprep.subr.bf16.mxu0 0
        %953 = vmatpush2.bf16.msra.mxu0 0
        %954 = vmatprep.subr.bf16.mxu0 0
        %955 = vmatpush2.bf16.msra.mxu0 0
        %956 = vmatprep.subr.bf16.mxu0 0
        %957 = vmatpush2.bf16.msra.mxu0 0
        %958 = vmatprep.subr.bf16.mxu0 0
        %959 = vmatpush2.bf16.msra.mxu0 0
        %960 = vmatprep.subr.bf16.mxu0 0
        %961 = vmatpush2.bf16.msra.mxu0 0
        %962 = vmatprep.subr.bf16.mxu0 0
        %963 = vmatpush2.bf16.msra.mxu0 0
        %964 = vmatprep.mubr.bf16.mxu0 0
        %965 = vmatmul.mubr.bf16.gmra.mxu0 %v882
        %v966 = vpop.f32.mrf.mxu0
        %v967 = vadd.f32 0.0, %v966
        %v968 = vpop.f32.mrf.mxu0
        %v969 = vpop.f32.mrf.mxu0
        %v970 = vadd.f32 0.0, %v969
        %v971 = vpop.f32.mrf.mxu0
        %972 = vdwg.mxu0
        %v973 = vadd.f32 %v859, %v967
        %v974 = vadd.f32 %v862, %v970
        %v975 = vld [vmem:[#allocation2 + $0x8] sm:$0xf]
        %v976 = vld [vmem:[#allocation2 + $0xc] sm:$0xf]
        %v977 = vld [vmem:[#allocation2 + $0x10] sm:$0x1]
        %s978 = scalar_lea.vmem [#allocation8], 192
        %v979 = vld [vmem:[%s978] sm:$0xf]
        %v980 = vld [vmem:[%s978 + $0x4] sm:$0xf]
        %v981 = vld [vmem:[%s978 + $0x8] sm:$0xf]
        %v982 = vld [vmem:[%s978 + $0xc] sm:$0xf]
        %v983 = vld [vmem:[%s978 + $0x10] sm:$0xf]
        %v984 = vld [vmem:[%s978 + $0x14] sm:$0xf]
        %v985 = vld [vmem:[%s978 + $0x18] sm:$0xf]
        %v986 = vld [vmem:[%s978 + $0x1c] sm:$0xf]
        %v987 = vld [vmem:[%s978 + $0x20] sm:$0xf]
        %v988 = vld [vmem:[%s978 + $0x24] sm:$0xf]
        %v989 = vld [vmem:[%s978 + $0x28] sm:$0xf]
        %v990 = vld [vmem:[%s978 + $0x2c] sm:$0xf]
        %v991 = vld [vmem:[%s978 + $0x30] sm:$0xf]
        %v992 = vld [vmem:[%s978 + $0x34] sm:$0xf]
        %v993 = vld [vmem:[%s978 + $0x38] sm:$0xf]
        %v994 = vld [vmem:[%s978 + $0x3c] sm:$0xf]
        %v998 = vunpack.c.l.b16 %v975
        %v999 = vunpack.c.l.b16 %v976
        %v1000 = vunpack.c.l.b16 %v977
        %v1001 = vpack.c.b16 %v999, %v998
        %v1002 = vpack.c.b16 %v1000, %v1000
        %vm1003 = vsmask.f32 7424
        %v1005 = vshrl.u32 %v1001, 16
        %v1007 = vshll.u32 %v1001, 16
        %v1009 = vrot.slane %v1007, 1
        %v1010 = vor.u32 %v1005, %v1009
        %v1012 = vshll.u32 %v1002, 16
        %v1014 = vrot.slane %v1012, 1
        %v1015 = vsel %vm1003, %v1010, %v1014
        %v1033 = vunpack.c.l.b16 %v979
        %v1034 = vunpack.c.l.b16 %v980
        %v1035 = vunpack.c.l.b16 %v981
        %v1036 = vunpack.c.l.b16 %v982
        %v1037 = vunpack.c.l.b16 %v983
        %v1038 = vunpack.c.l.b16 %v984
        %v1039 = vunpack.c.l.b16 %v985
        %v1040 = vunpack.c.l.b16 %v986
        %v1041 = vunpack.c.l.b16 %v987
        %v1042 = vunpack.c.l.b16 %v988
        %v1043 = vunpack.c.l.b16 %v989
        %v1044 = vunpack.c.l.b16 %v990
        %v1045 = vunpack.c.l.b16 %v991
        %v1046 = vunpack.c.l.b16 %v992
        %v1047 = vunpack.c.l.b16 %v993
        %v1048 = vunpack.c.l.b16 %v994
        %v1049 = vpack.c.b16 %v1034, %v1033
        %v1050 = vpack.c.b16 %v1036, %v1035
        %v1051 = vpack.c.b16 %v1038, %v1037
        %v1052 = vpack.c.b16 %v1040, %v1039
        %v1053 = vpack.c.b16 %v1042, %v1041
        %v1054 = vpack.c.b16 %v1044, %v1043
        %v1055 = vpack.c.b16 %v1046, %v1045
        %v1056 = vpack.c.b16 %v1048, %v1047
        %1065 = vmatprep.subr.bf16.mxu0 0
        %1066 = vmatpush1.bf16.msra.mxu0 %v1056
        %1067 = vmatprep.subr.bf16.mxu0 0
        %1068 = vmatpush1.bf16.msra.mxu0 %v1055
        %1069 = vmatprep.subr.bf16.mxu0 0
        %1070 = vmatpush1.bf16.msra.mxu0 %v1054
        %1071 = vmatprep.subr.bf16.mxu0 0
        %1072 = vmatpush1.bf16.msra.mxu0 %v1053
        %1073 = vmatprep.subr.bf16.mxu0 0
        %1074 = vmatpush1.bf16.msra.mxu0 %v1052
        %1075 = vmatprep.subr.bf16.mxu0 0
        %1076 = vmatpush1.bf16.msra.mxu0 %v1051
        %1077 = vmatprep.subr.bf16.mxu0 0
        %1078 = vmatpush1.bf16.msra.mxu0 %v1050
        %1079 = vmatprep.subr.bf16.mxu0 0
        %1080 = vmatpush1.bf16.msra.mxu0 %v1049
        %1081 = vmatprep.subr.bf16.mxu0 0
        %1082 = vmatpush2.bf16.msra.mxu0 0
        %1083 = vmatprep.subr.bf16.mxu0 0
        %1084 = vmatpush2.bf16.msra.mxu0 0
        %1085 = vmatprep.subr.bf16.mxu0 0
        %1086 = vmatpush2.bf16.msra.mxu0 0
        %1087 = vmatprep.subr.bf16.mxu0 0
        %1088 = vmatpush2.bf16.msra.mxu0 0
        %1089 = vmatprep.subr.bf16.mxu0 0
        %1090 = vmatpush2.bf16.msra.mxu0 0
        %1091 = vmatprep.subr.bf16.mxu0 0
        %1092 = vmatpush2.bf16.msra.mxu0 0
        %1093 = vmatprep.subr.bf16.mxu0 0
        %1094 = vmatpush2.bf16.msra.mxu0 0
        %1095 = vmatprep.subr.bf16.mxu0 0
        %1096 = vmatpush2.bf16.msra.mxu0 0
        %1097 = vmatprep.mubr.bf16.mxu0 0
        %1098 = vmatmul.mubr.bf16.gmra.mxu0 %v1015
        %v1099 = vpop.f32.mrf.mxu0
        %v1100 = vadd.f32 0.0, %v1099
        %v1101 = vpop.f32.mrf.mxu0
        %v1102 = vpop.f32.mrf.mxu0
        %v1103 = vadd.f32 0.0, %v1102
        %v1104 = vpop.f32.mrf.mxu0
        %1105 = vdwg.mxu0
        %v1106 = vadd.f32 %v973, %v1100
        %v1107 = vadd.f32 %v974, %v1103
        %v1108 = vld [vmem:[#allocation2 + $0x8] sm:$0xe]
        %s1109 = scalar_lea.vmem [#allocation8], 256
        %v1110 = vld [vmem:[%s1109] sm:$0xf]
        %v1111 = vld [vmem:[%s1109 + $0x4] sm:$0xf]
        %v1112 = vld [vmem:[%s1109 + $0x8] sm:$0xf]
        %v1113 = vld [vmem:[%s1109 + $0xc] sm:$0xf]
        %v1114 = vld [vmem:[%s1109 + $0x10] sm:$0xf]
        %v1115 = vld [vmem:[%s1109 + $0x14] sm:$0xf]
        %v1116 = vld [vmem:[%s1109 + $0x18] sm:$0xf]
        %v1117 = vld [vmem:[%s1109 + $0x1c] sm:$0xf]
        %v1118 = vld [vmem:[%s1109 + $0x20] sm:$0xf]
        %v1119 = vld [vmem:[%s1109 + $0x24] sm:$0xf]
        %v1120 = vld [vmem:[%s1109 + $0x28] sm:$0xf]
        %v1121 = vld [vmem:[%s1109 + $0x2c] sm:$0xf]
        %v1122 = vld [vmem:[%s1109 + $0x30] sm:$0xf]
        %v1123 = vld [vmem:[%s1109 + $0x34] sm:$0xf]
        %v1124 = vld [vmem:[%s1109 + $0x38] sm:$0xf]
        %v1125 = vld [vmem:[%s1109 + $0x3c] sm:$0xf]
        %v1127 = vunpack.c.l.b16 %v1108
        %v1128 = vpack.c.b16 %v999, %v1127
        %vm1129 = vcmask 1046528
        %v1130 = vrot.slane %v1128, 1
        %v1131 = vrot.slane %v1002, 1
        %v1132 = vsel %vm1129, %v1130, %v1131
        %v1150 = vunpack.c.l.b16 %v1110
        %v1151 = vunpack.c.l.b16 %v1111
        %v1152 = vunpack.c.l.b16 %v1112
        %v1153 = vunpack.c.l.b16 %v1113
        %v1154 = vunpack.c.l.b16 %v1114
        %v1155 = vunpack.c.l.b16 %v1115
        %v1156 = vunpack.c.l.b16 %v1116
        %v1157 = vunpack.c.l.b16 %v1117
        %v1158 = vunpack.c.l.b16 %v1118
        %v1159 = vunpack.c.l.b16 %v1119
        %v1160 = vunpack.c.l.b16 %v1120
        %v1161 = vunpack.c.l.b16 %v1121
        %v1162 = vunpack.c.l.b16 %v1122
        %v1163 = vunpack.c.l.b16 %v1123
        %v1164 = vunpack.c.l.b16 %v1124
        %v1165 = vunpack.c.l.b16 %v1125
        %v1166 = vpack.c.b16 %v1151, %v1150
        %v1167 = vpack.c.b16 %v1153, %v1152
        %v1168 = vpack.c.b16 %v1155, %v1154
        %v1169 = vpack.c.b16 %v1157, %v1156
        %v1170 = vpack.c.b16 %v1159, %v1158
        %v1171 = vpack.c.b16 %v1161, %v1160
        %v1172 = vpack.c.b16 %v1163, %v1162
        %v1173 = vpack.c.b16 %v1165, %v1164
        %1182 = vmatprep.subr.bf16.mxu0 0
        %1183 = vmatpush1.bf16.msra.mxu0 %v1173
        %1184 = vmatprep.subr.bf16.mxu0 0
        %1185 = vmatpush1.bf16.msra.mxu0 %v1172
        %1186 = vmatprep.subr.bf16.mxu0 0
        %1187 = vmatpush1.bf16.msra.mxu0 %v1171
        %1188 = vmatprep.subr.bf16.mxu0 0
        %1189 = vmatpush1.bf16.msra.mxu0 %v1170
        %1190 = vmatprep.subr.bf16.mxu0 0
        %1191 = vmatpush1.bf16.msra.mxu0 %v1169
        %1192 = vmatprep.subr.bf16.mxu0 0
        %1193 = vmatpush1.bf16.msra.mxu0 %v1168
        %1194 = vmatprep.subr.bf16.mxu0 0
        %1195 = vmatpush1.bf16.msra.mxu0 %v1167
        %1196 = vmatprep.subr.bf16.mxu0 0
        %1197 = vmatpush1.bf16.msra.mxu0 %v1166
        %1198 = vmatprep.subr.bf16.mxu0 0
        %1199 = vmatpush2.bf16.msra.mxu0 0
        %1200 = vmatprep.subr.bf16.mxu0 0
        %1201 = vmatpush2.bf16.msra.mxu0 0
        %1202 = vmatprep.subr.bf16.mxu0 0
        %1203 = vmatpush2.bf16.msra.mxu0 0
        %1204 = vmatprep.subr.bf16.mxu0 0
        %1205 = vmatpush2.bf16.msra.mxu0 0
        %1206 = vmatprep.subr.bf16.mxu0 0
        %1207 = vmatpush2.bf16.msra.mxu0 0
        %1208 = vmatprep.subr.bf16.mxu0 0
        %1209 = vmatpush2.bf16.msra.mxu0 0
        %1210 = vmatprep.subr.bf16.mxu0 0
        %1211 = vmatpush2.bf16.msra.mxu0 0
        %1212 = vmatprep.subr.bf16.mxu0 0
        %1213 = vmatpush2.bf16.msra.mxu0 0
        %1214 = vmatprep.mubr.bf16.mxu0 0
        %1215 = vmatmul.mubr.bf16.gmra.mxu0 %v1132
        %v1216 = vpop.f32.mrf.mxu0
        %v1217 = vadd.f32 0.0, %v1216
        %v1218 = vpop.f32.mrf.mxu0
        %v1219 = vpop.f32.mrf.mxu0
        %v1220 = vadd.f32 0.0, %v1219
        %v1221 = vpop.f32.mrf.mxu0
        %1222 = vdwg.mxu0
        %v1223 = vadd.f32 %v1106, %v1217
        %v1224 = vadd.f32 %v1107, %v1220
        %v1225 = vld [vmem:[%s6] sm:$0x1]
        %v1227 = vlaneseq
        %v1228 = vshrl.u32 %v1227, 7
        %v1229 = vsub.s32 0, %v1228
        %v1230 = vrot.slane %v1225, %v1229
        %v1232 = vadd.f32 %v1223, %v1230
        %v1233 = vadd.f32 %v1224, %v1230
        %v1234 = vmul.f32 %v1232, 0.5
        %v1235 = vmul.f32 %v1233, 0.5
        %v1236 = vmul.f32 %v1232, %v1232
        %v1237 = vmul.f32 %v1233, %v1233
        %v1238 = vmul.f32 %v1236, %v1232
        %v1239 = vmul.f32 %v1237, %v1233
        %v1240 = vmul.f32 %v1238, 0.044715
        %v1241 = vmul.f32 %v1239, 0.044715
        %v1242 = vadd.f32 %v1232, %v1240
        %v1243 = vadd.f32 %v1233, %v1241
        %v1244 = vmul.f32 %v1242, 0.7978846
        %v1245 = vmul.f32 %v1243, 0.7978846
        %v1246 = vtanh.pop %v1244
        %v1247 = vtanh.pop %v1245
        %v1248 = vadd.f32 %v1246, 1.0
        %v1249 = vadd.f32 %v1247, 1.0
        %v1250 = vmul.f32 %v1234, %v1248
        %v1251 = vmul.f32 %v1235, %v1249
        %v1252 = vadd.f32 %v603, %v1250
        %v1253 = vadd.f32 %v604, %v1251
        %v1254 = vld [vmem:[%s7] sm:$0x1]
        %v1255 = vld [vmem:[%s8] sm:$0x1]
        %1256 = vadd.xlane.f32.xlu0 %v1252
        %v1257 = vpop.xlane.xlu0 %1256
        %1258 = vadd.xlane.f32.xlu0 %v1253
        %v1259 = vpop.xlane.xlu0 %1258
        %v1260 = vmul.f32 %v1257, 0.03125
        %v1261 = vmul.f32 %v1259, 0.03125
        %v1262 = vmul.f32 %v1252, %v1252
        %v1263 = vmul.f32 %v1253, %v1253
        %1264 = vadd.xlane.f32.xlu0 %v1262
        %v1265 = vpop.xlane.xlu0 %1264
        %1266 = vadd.xlane.f32.xlu0 %v1263
        %v1267 = vpop.xlane.xlu0 %1266
        %v1268 = vmul.f32 %v1265, 0.03125
        %v1269 = vmul.f32 %v1267, 0.03125
        %v1270 = vmul.f32 %v1260, %v1260
        %v1271 = vmul.f32 %v1261, %v1261
        %v1272 = vsub.f32 %v1268, %v1270
        %v1273 = vsub.f32 %v1269, %v1271
        %v1274 = vsub.f32 %v1252, %v1260
        %v1275 = vsub.f32 %v1253, %v1261
        %v1276 = vadd.f32 %v1272, 1e-05
        %v1277 = vadd.f32 %v1273, 1e-05
        %v1278 = vrsqrt.pop %v1276
        %v1279 = vrsqrt.pop %v1277
        %v1280 = vmul.f32 %v1274, %v1278
        %v1281 = vmul.f32 %v1275, %v1279
        %v1283 = vlaneseq
        %v1284 = vshrl.u32 %v1283, 7
        %v1285 = vsub.s32 0, %v1284
        %v1286 = vrot.slane %v1254, %v1285
        %v1288 = vmul.f32 %v1280, %v1286
        %v1289 = vmul.f32 %v1281, %v1286
        %v1291 = vlaneseq
        %v1292 = vshrl.u32 %v1291, 7
        %v1293 = vsub.s32 0, %v1292
        %v1294 = vrot.slane %v1255, %v1293
        %v1296 = vadd.f32 %v1288, %v1294
        %v1297 = vadd.f32 %v1289, %v1294
        %v1298 = vmul.f32 %v1296, %v548
        %v1299 = vmul.f32 %v1297, %v553
        %v1300 = vpack.c.bf16 %v1299, %v1298
        %v1302 = vunpack.c.l.b16 %v1300
        %v1303 = vunpack.c.h.b16 %v1300
        %v1304 = vpack.c.b16 %v1302, %v1302
        %v1305 = vpack.c.b16 %v1303, %v1303
        %1308 = vst [vmem:[#allocation2 + $0x8] sm:$0xf] %v1304
        %1309 = vst [vmem:[#allocation2 + $0xc] sm:$0xf] %v1305
        %v1310 = vld [vmem:[#allocation2 + $0x4] sm:$0x8]
        %v1311 = vld [vmem:[#allocation2 + $0x8] sm:$0xf]
        %v1312 = vld [vmem:[#allocation2 + $0xc] sm:$0x7]
        %s1313 = scalar_lea.vmem [#allocation8], 320
        %v1314 = vld [vmem:[%s1313] sm:$0xf]
        %v1315 = vld [vmem:[%s1313 + $0x4] sm:$0xf]
        %v1316 = vld [vmem:[%s1313 + $0x8] sm:$0xf]
        %v1317 = vld [vmem:[%s1313 + $0xc] sm:$0xf]
        %v1318 = vld [vmem:[%s1313 + $0x10] sm:$0xf]
        %v1319 = vld [vmem:[%s1313 + $0x14] sm:$0xf]
        %v1320 = vld [vmem:[%s1313 + $0x18] sm:$0xf]
        %v1321 = vld [vmem:[%s1313 + $0x1c] sm:$0xf]
        %v1322 = vld [vmem:[%s1313 + $0x20] sm:$0xf]
        %v1323 = vld [vmem:[%s1313 + $0x24] sm:$0xf]
        %v1324 = vld [vmem:[%s1313 + $0x28] sm:$0xf]
        %v1325 = vld [vmem:[%s1313 + $0x2c] sm:$0xf]
        %v1326 = vld [vmem:[%s1313 + $0x30] sm:$0xf]
        %v1327 = vld [vmem:[%s1313 + $0x34] sm:$0xf]
        %v1328 = vld [vmem:[%s1313 + $0x38] sm:$0xf]
        %v1329 = vld [vmem:[%s1313 + $0x3c] sm:$0xf]
        %v1330 = vld [vmem:[#allocation2 + $0xc] sm:$0xf]
        %s1331 = scalar_lea.vmem [#allocation8], 384
        %v1332 = vld [vmem:[%s1331] sm:$0xf]
        %v1333 = vld [vmem:[%s1331 + $0x4] sm:$0xf]
        %v1334 = vld [vmem:[%s1331 + $0x8] sm:$0xf]
        %v1335 = vld [vmem:[%s1331 + $0xc] sm:$0xf]
        %v1336 = vld [vmem:[%s1331 + $0x10] sm:$0xf]
        %v1337 = vld [vmem:[%s1331 + $0x14] sm:$0xf]
        %v1338 = vld [vmem:[%s1331 + $0x18] sm:$0xf]
        %v1339 = vld [vmem:[%s1331 + $0x1c] sm:$0xf]
        %v1340 = vld [vmem:[%s1331 + $0x20] sm:$0xf]
        %v1341 = vld [vmem:[%s1331 + $0x24] sm:$0xf]
        %v1342 = vld [vmem:[%s1331 + $0x28] sm:$0xf]
        %v1343 = vld [vmem:[%s1331 + $0x2c] sm:$0xf]
        %v1344 = vld [vmem:[%s1331 + $0x30] sm:$0xf]
        %v1345 = vld [vmem:[%s1331 + $0x34] sm:$0xf]
        %v1346 = vld [vmem:[%s1331 + $0x38] sm:$0xf]
        %v1347 = vld [vmem:[%s1331 + $0x3c] sm:$0xf]
        %v1351 = vunpack.c.l.b16 %v1310
        %v1352 = vunpack.c.l.b16 %v1311
        %v1353 = vunpack.c.l.b16 %v1330
        %v1354 = vpack.c.b16 %v1352, %v1351
        %v1355 = vpack.c.b16 %v1353, %v1353
        %v1357 = vshrl.u32 %v1354, 16
        %v1359 = vrot.slane %v1357, 3
        %v1360 = vshll.u32 %v1354, 16
        %v1362 = vrot.slane %v1360, 4
        %v1363 = vor.u32 %v1359, %v1362
        %v1365 = vshrl.u32 %v1355, 16
        %v1367 = vrot.slane %v1365, 3
        %v1368 = vshll.u32 %v1355, 16
        %v1370 = vrot.slane %v1368, 4
        %v1371 = vor.u32 %v1367, %v1370
        %v1372 = vsel %vm660, %v1363, %v1371
        %v1390 = vunpack.c.l.b16 %v1332
        %v1391 = vunpack.c.l.b16 %v1333
        %v1392 = vunpack.c.l.b16 %v1334
        %v1393 = vunpack.c.l.b16 %v1335
        %v1394 = vunpack.c.l.b16 %v1336
        %v1395 = vunpack.c.l.b16 %v1337
        %v1396 = vunpack.c.l.b16 %v1338
        %v1397 = vunpack.c.l.b16 %v1339
        %v1398 = vunpack.c.l.b16 %v1340
        %v1399 = vunpack.c.l.b16 %v1341
        %v1400 = vunpack.c.l.b16 %v1342
        %v1401 = vunpack.c.l.b16 %v1343
        %v1402 = vunpack.c.l.b16 %v1344
        %v1403 = vunpack.c.l.b16 %v1345
        %v1404 = vunpack.c.l.b16 %v1346
        %v1405 = vunpack.c.l.b16 %v1347
        %v1406 = vpack.c.b16 %v1391, %v1390
        %v1407 = vpack.c.b16 %v1393, %v1392
        %v1408 = vpack.c.b16 %v1395, %v1394
        %v1409 = vpack.c.b16 %v1397, %v1396
        %v1410 = vpack.c.b16 %v1399, %v1398
        %v1411 = vpack.c.b16 %v1401, %v1400
        %v1412 = vpack.c.b16 %v1403, %v1402
        %v1413 = vpack.c.b16 %v1405, %v1404
        %1422 = vmatprep.subr.bf16.mxu0 0
        %1423 = vmatpush1.bf16.msra.mxu0 %v1413
        %1424 = vmatprep.subr.bf16.mxu0 0
        %1425 = vmatpush1.bf16.msra.mxu0 %v1412
        %1426 = vmatprep.subr.bf16.mxu0 0
        %1427 = vmatpush1.bf16.msra.mxu0 %v1411
        %1428 = vmatprep.subr.bf16.mxu0 0
        %1429 = vmatpush1.bf16.msra.mxu0 %v1410
        %1430 = vmatprep.subr.bf16.mxu0 0
        %1431 = vmatpush1.bf16.msra.mxu0 %v1409
        %1432 = vmatprep.subr.bf16.mxu0 0
        %1433 = vmatpush1.bf16.msra.mxu0 %v1408
        %1434 = vmatprep.subr.bf16.mxu0 0
        %1435 = vmatpush1.bf16.msra.mxu0 %v1407
        %1436 = vmatprep.subr.bf16.mxu0 0
        %1437 = vmatpush1.bf16.msra.mxu0 %v1406
        %1438 = vmatprep.subr.bf16.mxu0 0
        %1439 = vmatpush2.bf16.msra.mxu0 0
        %1440 = vmatprep.subr.bf16.mxu0 0
        %1441 = vmatpush2.bf16.msra.mxu0 0
        %1442 = vmatprep.subr.bf16.mxu0 0
        %1443 = vmatpush2.bf16.msra.mxu0 0
        %1444 = vmatprep.subr.bf16.mxu0 0
        %1445 = vmatpush2.bf16.msra.mxu0 0
        %1446 = vmatprep.subr.bf16.mxu0 0
        %1447 = vmatpush2.bf16.msra.mxu0 0
        %1448 = vmatprep.subr.bf16.mxu0 0
        %1449 = vmatpush2.bf16.msra.mxu0 0
        %1450 = vmatprep.subr.bf16.mxu0 0
        %1451 = vmatpush2.bf16.msra.mxu0 0
        %1452 = vmatprep.subr.bf16.mxu0 0
        %1453 = vmatpush2.bf16.msra.mxu0 0
        %1454 = vmatprep.mubr.bf16.mxu0 0
        %1455 = vmatmul.mubr.bf16.gmra.mxu0 %v1372
        %v1456 = vpop.f32.mrf.mxu0
        %v1457 = vadd.f32 0.0, %v1456
        %v1458 = vpop.f32.mrf.mxu0
        %v1459 = vpop.f32.mrf.mxu0
        %v1460 = vadd.f32 0.0, %v1459
        %v1461 = vpop.f32.mrf.mxu0
        %1462 = vdwg.mxu0
        %v1464 = vunpack.c.l.b16 %v1312
        %v1465 = vpack.c.b16 %v1464, %v1464
        %v1466 = vrot.slane %v1354, 3
        %v1467 = vrot.slane %v1465, 3
        %v1468 = vsel %vm771, %v1466, %v1467
        %v1486 = vunpack.c.l.b16 %v1314
        %v1487 = vunpack.c.l.b16 %v1315
        %v1488 = vunpack.c.l.b16 %v1316
        %v1489 = vunpack.c.l.b16 %v1317
        %v1490 = vunpack.c.l.b16 %v1318
        %v1491 = vunpack.c.l.b16 %v1319
        %v1492 = vunpack.c.l.b16 %v1320
        %v1493 = vunpack.c.l.b16 %v1321
        %v1494 = vunpack.c.l.b16 %v1322
        %v1495 = vunpack.c.l.b16 %v1323
        %v1496 = vunpack.c.l.b16 %v1324
        %v1497 = vunpack.c.l.b16 %v1325
        %v1498 = vunpack.c.l.b16 %v1326
        %v1499 = vunpack.c.l.b16 %v1327
        %v1500 = vunpack.c.l.b16 %v1328
        %v1501 = vunpack.c.l.b16 %v1329
        %v1502 = vpack.c.b16 %v1487, %v1486
        %v1503 = vpack.c.b16 %v1489, %v1488
        %v1504 = vpack.c.b16 %v1491, %v1490
        %v1505 = vpack.c.b16 %v1493, %v1492
        %v1506 = vpack.c.b16 %v1495, %v1494
        %v1507 = vpack.c.b16 %v1497, %v1496
        %v1508 = vpack.c.b16 %v1499, %v1498
        %v1509 = vpack.c.b16 %v1501, %v1500
        %1518 = vmatprep.subr.bf16.mxu0 0
        %1519 = vmatpush1.bf16.msra.mxu0 %v1509
        %1520 = vmatprep.subr.bf16.mxu0 0
        %1521 = vmatpush1.bf16.msra.mxu0 %v1508
        %1522 = vmatprep.subr.bf16.mxu0 0
        %1523 = vmatpush1.bf16.msra.mxu0 %v1507
        %1524 = vmatprep.subr.bf16.mxu0 0
        %1525 = vmatpush1.bf16.msra.mxu0 %v1506
        %1526 = vmatprep.subr.bf16.mxu0 0
        %1527 = vmatpush1.bf16.msra.mxu0 %v1505
        %1528 = vmatprep.subr.bf16.mxu0 0
        %1529 = vmatpush1.bf16.msra.mxu0 %v1504
        %1530 = vmatprep.subr.bf16.mxu0 0
        %1531 = vmatpush1.bf16.msra.mxu0 %v1503
        %1532 = vmatprep.subr.bf16.mxu0 0
        %1533 = vmatpush1.bf16.msra.mxu0 %v1502
        %1534 = vmatprep.subr.bf16.mxu0 0
        %1535 = vmatpush2.bf16.msra.mxu0 0
        %1536 = vmatprep.subr.bf16.mxu0 0
        %1537 = vmatpush2.bf16.msra.mxu0 0
        %1538 = vmatprep.subr.bf16.mxu0 0
        %1539 = vmatpush2.bf16.msra.mxu0 0
        %1540 = vmatprep.subr.bf16.mxu0 0
        %1541 = vmatpush2.bf16.msra.mxu0 0
        %1542 = vmatprep.subr.bf16.mxu0 0
        %1543 = vmatpush2.bf16.msra.mxu0 0
        %1544 = vmatprep.subr.bf16.mxu0 0
        %1545 = vmatpush2.bf16.msra.mxu0 0
        %1546 = vmatprep.subr.bf16.mxu0 0
        %1547 = vmatpush2.bf16.msra.mxu0 0
        %1548 = vmatprep.subr.bf16.mxu0 0
        %1549 = vmatpush2.bf16.msra.mxu0 0
        %1550 = vmatprep.mubr.bf16.mxu0 0
        %1551 = vmatmul.mubr.bf16.gmra.mxu0 %v1468
        %v1552 = vpop.f32.mrf.mxu0
        %v1553 = vadd.f32 %v1457, %v1552
        %v1554 = vpop.f32.mrf.mxu0
        %v1555 = vpop.f32.mrf.mxu0
        %v1556 = vadd.f32 %v1460, %v1555
        %v1557 = vpop.f32.mrf.mxu0
        %1558 = vdwg.mxu0
        %s1559 = scalar_lea.vmem [#allocation8], 448
        %v1560 = vld [vmem:[%s1559] sm:$0xf]
        %v1561 = vld [vmem:[%s1559 + $0x4] sm:$0xf]
        %v1562 = vld [vmem:[%s1559 + $0x8] sm:$0xf]
        %v1563 = vld [vmem:[%s1559 + $0xc] sm:$0xf]
        %v1564 = vld [vmem:[%s1559 + $0x10] sm:$0xf]
        %v1565 = vld [vmem:[%s1559 + $0x14] sm:$0xf]
        %v1566 = vld [vmem:[%s1559 + $0x18] sm:$0xf]
        %v1567 = vld [vmem:[%s1559 + $0x1c] sm:$0xf]
        %v1568 = vld [vmem:[%s1559 + $0x20] sm:$0xf]
        %v1569 = vld [vmem:[%s1559 + $0x24] sm:$0xf]
        %v1570 = vld [vmem:[%s1559 + $0x28] sm:$0xf]
        %v1571 = vld [vmem:[%s1559 + $0x2c] sm:$0xf]
        %v1572 = vld [vmem:[%s1559 + $0x30] sm:$0xf]
        %v1573 = vld [vmem:[%s1559 + $0x34] sm:$0xf]
        %v1574 = vld [vmem:[%s1559 + $0x38] sm:$0xf]
        %v1575 = vld [vmem:[%s1559 + $0x3c] sm:$0xf]
        %v1576 = vpack.c.b16 %v1353, %v1352
        %v1594 = vunpack.c.l.b16 %v1560
        %v1595 = vunpack.c.l.b16 %v1561
        %v1596 = vunpack.c.l.b16 %v1562
        %v1597 = vunpack.c.l.b16 %v1563
        %v1598 = vunpack.c.l.b16 %v1564
        %v1599 = vunpack.c.l.b16 %v1565
        %v1600 = vunpack.c.l.b16 %v1566
        %v1601 = vunpack.c.l.b16 %v1567
        %v1602 = vunpack.c.l.b16 %v1568
        %v1603 = vunpack.c.l.b16 %v1569
        %v1604 = vunpack.c.l.b16 %v1570
        %v1605 = vunpack.c.l.b16 %v1571
        %v1606 = vunpack.c.l.b16 %v1572
        %v1607 = vunpack.c.l.b16 %v1573
        %v1608 = vunpack.c.l.b16 %v1574
        %v1609 = vunpack.c.l.b16 %v1575
        %v1610 = vpack.c.b16 %v1595, %v1594
        %v1611 = vpack.c.b16 %v1597, %v1596
        %v1612 = vpack.c.b16 %v1599, %v1598
        %v1613 = vpack.c.b16 %v1601, %v1600
        %v1614 = vpack.c.b16 %v1603, %v1602
        %v1615 = vpack.c.b16 %v1605, %v1604
        %v1616 = vpack.c.b16 %v1607, %v1606
        %v1617 = vpack.c.b16 %v1609, %v1608
        %1626 = vmatprep.subr.bf16.mxu0 0
        %1627 = vmatpush1.bf16.msra.mxu0 %v1617
        %1628 = vmatprep.subr.bf16.mxu0 0
        %1629 = vmatpush1.bf16.msra.mxu0 %v1616
        %1630 = vmatprep.subr.bf16.mxu0 0
        %1631 = vmatpush1.bf16.msra.mxu0 %v1615
        %1632 = vmatprep.subr.bf16.mxu0 0
        %1633 = vmatpush1.bf16.msra.mxu0 %v1614
        %1634 = vmatprep.subr.bf16.mxu0 0
        %1635 = vmatpush1.bf16.msra.mxu0 %v1613
        %1636 = vmatprep.subr.bf16.mxu0 0
        %1637 = vmatpush1.bf16.msra.mxu0 %v1612
        %1638 = vmatprep.subr.bf16.mxu0 0
        %1639 = vmatpush1.bf16.msra.mxu0 %v1611
        %1640 = vmatprep.subr.bf16.mxu0 0
        %1641 = vmatpush1.bf16.msra.mxu0 %v1610
        %1642 = vmatprep.subr.bf16.mxu0 0
        %1643 = vmatpush2.bf16.msra.mxu0 0
        %1644 = vmatprep.subr.bf16.mxu0 0
        %1645 = vmatpush2.bf16.msra.mxu0 0
        %1646 = vmatprep.subr.bf16.mxu0 0
        %1647 = vmatpush2.bf16.msra.mxu0 0
        %1648 = vmatprep.subr.bf16.mxu0 0
        %1649 = vmatpush2.bf16.msra.mxu0 0
        %1650 = vmatprep.subr.bf16.mxu0 0
        %1651 = vmatpush2.bf16.msra.mxu0 0
        %1652 = vmatprep.subr.bf16.mxu0 0
        %1653 = vmatpush2.bf16.msra.mxu0 0
        %1654 = vmatprep.subr.bf16.mxu0 0
        %1655 = vmatpush2.bf16.msra.mxu0 0
        %1656 = vmatprep.subr.bf16.mxu0 0
        %1657 = vmatpush2.bf16.msra.mxu0 0
        %1658 = vmatprep.mubr.bf16.mxu0 0
        %1659 = vmatmul.mubr.bf16.gmra.mxu0 %v1576
        %v1660 = vpop.f32.mrf.mxu0
        %v1661 = vadd.f32 0.0, %v1660
        %v1662 = vpop.f32.mrf.mxu0
        %v1663 = vpop.f32.mrf.mxu0
        %v1664 = vadd.f32 0.0, %v1663
        %v1665 = vpop.f32.mrf.mxu0
        %1666 = vdwg.mxu0
        %v1667 = vadd.f32 %v1553, %v1661
        %v1668 = vadd.f32 %v1556, %v1664
        %v1669 = vld [vmem:[#allocation2 + $0x8] sm:$0xf]
        %v1670 = vld [vmem:[#allocation2 + $0xc] sm:$0xf]
        %v1671 = vld [vmem:[#allocation2 + $0x10] sm:$0x1]
        %s1672 = scalar_lea.vmem [#allocation8], 512
        %v1673 = vld [vmem:[%s1672] sm:$0xf]
        %v1674 = vld [vmem:[%s1672 + $0x4] sm:$0xf]
        %v1675 = vld [vmem:[%s1672 + $0x8] sm:$0xf]
        %v1676 = vld [vmem:[%s1672 + $0xc] sm:$0xf]
        %v1677 = vld [vmem:[%s1672 + $0x10] sm:$0xf]
        %v1678 = vld [vmem:[%s1672 + $0x14] sm:$0xf]
        %v1679 = vld [vmem:[%s1672 + $0x18] sm:$0xf]
        %v1680 = vld [vmem:[%s1672 + $0x1c] sm:$0xf]
        %v1681 = vld [vmem:[%s1672 + $0x20] sm:$0xf]
        %v1682 = vld [vmem:[%s1672 + $0x24] sm:$0xf]
        %v1683 = vld [vmem:[%s1672 + $0x28] sm:$0xf]
        %v1684 = vld [vmem:[%s1672 + $0x2c] sm:$0xf]
        %v1685 = vld [vmem:[%s1672 + $0x30] sm:$0xf]
        %v1686 = vld [vmem:[%s1672 + $0x34] sm:$0xf]
        %v1687 = vld [vmem:[%s1672 + $0x38] sm:$0xf]
        %v1688 = vld [vmem:[%s1672 + $0x3c] sm:$0xf]
        %v1692 = vunpack.c.l.b16 %v1669
        %v1693 = vunpack.c.l.b16 %v1670
        %v1694 = vunpack.c.l.b16 %v1671
        %v1695 = vpack.c.b16 %v1693, %v1692
        %v1696 = vpack.c.b16 %v1694, %v1694
        %v1698 = vshrl.u32 %v1695, 16
        %v1700 = vshll.u32 %v1695, 16
        %v1702 = vrot.slane %v1700, 1
        %v1703 = vor.u32 %v1698, %v1702
        %v1705 = vshll.u32 %v1696, 16
        %v1707 = vrot.slane %v1705, 1
        %v1708 = vsel %vm1003, %v1703, %v1707
        %v1726 = vunpack.c.l.b16 %v1673
        %v1727 = vunpack.c.l.b16 %v1674
        %v1728 = vunpack.c.l.b16 %v1675
        %v1729 = vunpack.c.l.b16 %v1676
        %v1730 = vunpack.c.l.b16 %v1677
        %v1731 = vunpack.c.l.b16 %v1678
        %v1732 = vunpack.c.l.b16 %v1679
        %v1733 = vunpack.c.l.b16 %v1680
        %v1734 = vunpack.c.l.b16 %v1681
        %v1735 = vunpack.c.l.b16 %v1682
        %v1736 = vunpack.c.l.b16 %v1683
        %v1737 = vunpack.c.l.b16 %v1684
        %v1738 = vunpack.c.l.b16 %v1685
        %v1739 = vunpack.c.l.b16 %v1686
        %v1740 = vunpack.c.l.b16 %v1687
        %v1741 = vunpack.c.l.b16 %v1688
        %v1742 = vpack.c.b16 %v1727, %v1726
        %v1743 = vpack.c.b16 %v1729, %v1728
        %v1744 = vpack.c.b16 %v1731, %v1730
        %v1745 = vpack.c.b16 %v1733, %v1732
        %v1746 = vpack.c.b16 %v1735, %v1734
        %v1747 = vpack.c.b16 %v1737, %v1736
        %v1748 = vpack.c.b16 %v1739, %v1738
        %v1749 = vpack.c.b16 %v1741, %v1740
        %1758 = vmatprep.subr.bf16.mxu0 0
        %1759 = vmatpush1.bf16.msra.mxu0 %v1749
        %1760 = vmatprep.subr.bf16.mxu0 0
        %1761 = vmatpush1.bf16.msra.mxu0 %v1748
        %1762 = vmatprep.subr.bf16.mxu0 0
        %1763 = vmatpush1.bf16.msra.mxu0 %v1747
        %1764 = vmatprep.subr.bf16.mxu0 0
        %1765 = vmatpush1.bf16.msra.mxu0 %v1746
        %1766 = vmatprep.subr.bf16.mxu0 0
        %1767 = vmatpush1.bf16.msra.mxu0 %v1745
        %1768 = vmatprep.subr.bf16.mxu0 0
        %1769 = vmatpush1.bf16.msra.mxu0 %v1744
        %1770 = vmatprep.subr.bf16.mxu0 0
        %1771 = vmatpush1.bf16.msra.mxu0 %v1743
        %1772 = vmatprep.subr.bf16.mxu0 0
        %1773 = vmatpush1.bf16.msra.mxu0 %v1742
        %1774 = vmatprep.subr.bf16.mxu0 0
        %1775 = vmatpush2.bf16.msra.mxu0 0
        %1776 = vmatprep.subr.bf16.mxu0 0
        %1777 = vmatpush2.bf16.msra.mxu0 0
        %1778 = vmatprep.subr.bf16.mxu0 0
        %1779 = vmatpush2.bf16.msra.mxu0 0
        %1780 = vmatprep.subr.bf16.mxu0 0
        %1781 = vmatpush2.bf16.msra.mxu0 0
        %1782 = vmatprep.subr.bf16.mxu0 0
        %1783 = vmatpush2.bf16.msra.mxu0 0
        %1784 = vmatprep.subr.bf16.mxu0 0
        %1785 = vmatpush2.bf16.msra.mxu0 0
        %1786 = vmatprep.subr.bf16.mxu0 0
        %1787 = vmatpush2.bf16.msra.mxu0 0
        %1788 = vmatprep.subr.bf16.mxu0 0
        %1789 = vmatpush2.bf16.msra.mxu0 0
        %1790 = vmatprep.mubr.bf16.mxu0 0
        %1791 = vmatmul.mubr.bf16.gmra.mxu0 %v1708
        %v1792 = vpop.f32.mrf.mxu0
        %v1793 = vadd.f32 0.0, %v1792
        %v1794 = vpop.f32.mrf.mxu0
        %v1795 = vpop.f32.mrf.mxu0
        %v1796 = vadd.f32 0.0, %v1795
        %v1797 = vpop.f32.mrf.mxu0
        %1798 = vdwg.mxu0
        %v1799 = vadd.f32 %v1667, %v1793
        %v1800 = vadd.f32 %v1668, %v1796
        %v1801 = vld [vmem:[#allocation2 + $0x8] sm:$0xe]
        %s1802 = scalar_lea.vmem [#allocation8], 576
        %v1803 = vld [vmem:[%s1802] sm:$0xf]
        %v1804 = vld [vmem:[%s1802 + $0x4] sm:$0xf]
        %v1805 = vld [vmem:[%s1802 + $0x8] sm:$0xf]
        %v1806 = vld [vmem:[%s1802 + $0xc] sm:$0xf]
        %v1807 = vld [vmem:[%s1802 + $0x10] sm:$0xf]
        %v1808 = vld [vmem:[%s1802 + $0x14] sm:$0xf]
        %v1809 = vld [vmem:[%s1802 + $0x18] sm:$0xf]
        %v1810 = vld [vmem:[%s1802 + $0x1c] sm:$0xf]
        %v1811 = vld [vmem:[%s1802 + $0x20] sm:$0xf]
        %v1812 = vld [vmem:[%s1802 + $0x24] sm:$0xf]
        %v1813 = vld [vmem:[%s1802 + $0x28] sm:$0xf]
        %v1814 = vld [vmem:[%s1802 + $0x2c] sm:$0xf]
        %v1815 = vld [vmem:[%s1802 + $0x30] sm:$0xf]
        %v1816 = vld [vmem:[%s1802 + $0x34] sm:$0xf]
        %v1817 = vld [vmem:[%s1802 + $0x38] sm:$0xf]
        %v1818 = vld [vmem:[%s1802 + $0x3c] sm:$0xf]
        %v1820 = vunpack.c.l.b16 %v1801
        %v1821 = vpack.c.b16 %v1693, %v1820
        %v1822 = vrot.slane %v1821, 1
        %v1823 = vrot.slane %v1696, 1
        %v1824 = vsel %vm1129, %v1822, %v1823
        %v1842 = vunpack.c.l.b16 %v1803
        %v1843 = vunpack.c.l.b16 %v1804
        %v1844 = vunpack.c.l.b16 %v1805
        %v1845 = vunpack.c.l.b16 %v1806
        %v1846 = vunpack.c.l.b16 %v1807
        %v1847 = vunpack.c.l.b16 %v1808
        %v1848 = vunpack.c.l.b16 %v1809
        %v1849 = vunpack.c.l.b16 %v1810
        %v1850 = vunpack.c.l.b16 %v1811
        %v1851 = vunpack.c.l.b16 %v1812
        %v1852 = vunpack.c.l.b16 %v1813
        %v1853 = vunpack.c.l.b16 %v1814
        %v1854 = vunpack.c.l.b16 %v1815
        %v1855 = vunpack.c.l.b16 %v1816
        %v1856 = vunpack.c.l.b16 %v1817
        %v1857 = vunpack.c.l.b16 %v1818
        %v1858 = vpack.c.b16 %v1843, %v1842
        %v1859 = vpack.c.b16 %v1845, %v1844
        %v1860 = vpack.c.b16 %v1847, %v1846
        %v1861 = vpack.c.b16 %v1849, %v1848
        %v1862 = vpack.c.b16 %v1851, %v1850
        %v1863 = vpack.c.b16 %v1853, %v1852
        %v1864 = vpack.c.b16 %v1855, %v1854
        %v1865 = vpack.c.b16 %v1857, %v1856
        %1874 = vmatprep.subr.bf16.mxu0 0
        %1875 = vmatpush1.bf16.msra.mxu0 %v1865
        %1876 = vmatprep.subr.bf16.mxu0 0
        %1877 = vmatpush1.bf16.msra.mxu0 %v1864
        %1878 = vmatprep.subr.bf16.mxu0 0
        %1879 = vmatpush1.bf16.msra.mxu0 %v1863
        %1880 = vmatprep.subr.bf16.mxu0 0
        %1881 = vmatpush1.bf16.msra.mxu0 %v1862
        %1882 = vmatprep.subr.bf16.mxu0 0
        %1883 = vmatpush1.bf16.msra.mxu0 %v1861
        %1884 = vmatprep.subr.bf16.mxu0 0
        %1885 = vmatpush1.bf16.msra.mxu0 %v1860
        %1886 = vmatprep.subr.bf16.mxu0 0
        %1887 = vmatpush1.bf16.msra.mxu0 %v1859
        %1888 = vmatprep.subr.bf16.mxu0 0
        %1889 = vmatpush1.bf16.msra.mxu0 %v1858
        %1890 = vmatprep.subr.bf16.mxu0 0
        %1891 = vmatpush2.bf16.msra.mxu0 0
        %1892 = vmatprep.subr.bf16.mxu0 0
        %1893 = vmatpush2.bf16.msra.mxu0 0
        %1894 = vmatprep.subr.bf16.mxu0 0
        %1895 = vmatpush2.bf16.msra.mxu0 0
        %1896 = vmatprep.subr.bf16.mxu0 0
        %1897 = vmatpush2.bf16.msra.mxu0 0
        %1898 = vmatprep.subr.bf16.mxu0 0
        %1899 = vmatpush2.bf16.msra.mxu0 0
        %1900 = vmatprep.subr.bf16.mxu0 0
        %1901 = vmatpush2.bf16.msra.mxu0 0
        %1902 = vmatprep.subr.bf16.mxu0 0
        %1903 = vmatpush2.bf16.msra.mxu0 0
        %1904 = vmatprep.subr.bf16.mxu0 0
        %1905 = vmatpush2.bf16.msra.mxu0 0
        %1906 = vmatprep.mubr.bf16.mxu0 0
        %1907 = vmatmul.mubr.bf16.gmra.mxu0 %v1824
        %v1908 = vpop.f32.mrf.mxu0
        %v1909 = vadd.f32 0.0, %v1908
        %v1910 = vpop.f32.mrf.mxu0
        %v1911 = vpop.f32.mrf.mxu0
        %v1912 = vadd.f32 0.0, %v1911
        %v1913 = vpop.f32.mrf.mxu0
        %1914 = vdwg.mxu0
        %v1915 = vadd.f32 %v1799, %v1909
        %v1916 = vadd.f32 %v1800, %v1912
        %s1917 = scalar_lea.vmem %s6, 1
        %v1918 = vld [vmem:[%s1917] sm:$0x1]
        %v1920 = vlaneseq
        %v1921 = vshrl.u32 %v1920, 7
        %v1922 = vsub.s32 0, %v1921
        %v1923 = vrot.slane %v1918, %v1922
        %v1925 = vadd.f32 %v1915, %v1923
        %v1926 = vadd.f32 %v1916, %v1923
        %v1927 = vmul.f32 %v1925, 0.5
        %v1928 = vmul.f32 %v1926, 0.5
        %v1929 = vmul.f32 %v1925, %v1925
        %v1930 = vmul.f32 %v1926, %v1926
        %v1931 = vmul.f32 %v1929, %v1925
        %v1932 = vmul.f32 %v1930, %v1926
        %v1933 = vmul.f32 %v1931, 0.044715
        %v1934 = vmul.f32 %v1932, 0.044715
        %v1935 = vadd.f32 %v1925, %v1933
        %v1936 = vadd.f32 %v1926, %v1934
        %v1937 = vmul.f32 %v1935, 0.7978846
        %v1938 = vmul.f32 %v1936, 0.7978846
        %v1939 = vtanh.pop %v1937
        %v1940 = vtanh.pop %v1938
        %v1941 = vadd.f32 %v1939, 1.0
        %v1942 = vadd.f32 %v1940, 1.0
        %v1943 = vmul.f32 %v1927, %v1941
        %v1944 = vmul.f32 %v1928, %v1942
        %v1945 = vadd.f32 %v1298, %v1943
        %v1946 = vadd.f32 %v1299, %v1944
        %s1947 = scalar_lea.vmem %s7, 1
        %v1948 = vld [vmem:[%s1947] sm:$0x1]
        %s1949 = scalar_lea.vmem %s8, 1
        %v1950 = vld [vmem:[%s1949] sm:$0x1]
        %1951 = vadd.xlane.f32.xlu0 %v1945
        %v1952 = vpop.xlane.xlu0 %1951
        %1953 = vadd.xlane.f32.xlu0 %v1946
        %v1954 = vpop.xlane.xlu0 %1953
        %v1955 = vmul.f32 %v1952, 0.03125
        %v1956 = vmul.f32 %v1954, 0.03125
        %v1957 = vmul.f32 %v1945, %v1945
        %v1958 = vmul.f32 %v1946, %v1946
        %1959 = vadd.xlane.f32.xlu0 %v1957
        %v1960 = vpop.xlane.xlu0 %1959
        %1961 = vadd.xlane.f32.xlu0 %v1958
        %v1962 = vpop.xlane.xlu0 %1961
        %v1963 = vmul.f32 %v1960, 0.03125
        %v1964 = vmul.f32 %v1962, 0.03125
        %v1965 = vmul.f32 %v1955, %v1955
        %v1966 = vmul.f32 %v1956, %v1956
        %v1967 = vsub.f32 %v1963, %v1965
        %v1968 = vsub.f32 %v1964, %v1966
        %v1969 = vsub.f32 %v1945, %v1955
        %v1970 = vsub.f32 %v1946, %v1956
        %v1971 = vadd.f32 %v1967, 1e-05
        %v1972 = vadd.f32 %v1968, 1e-05
        %v1973 = vrsqrt.pop %v1971
        %v1974 = vrsqrt.pop %v1972
        %v1975 = vmul.f32 %v1969, %v1973
        %v1976 = vmul.f32 %v1970, %v1974
        %v1978 = vlaneseq
        %v1979 = vshrl.u32 %v1978, 7
        %v1980 = vsub.s32 0, %v1979
        %v1981 = vrot.slane %v1948, %v1980
        %v1983 = vmul.f32 %v1975, %v1981
        %v1984 = vmul.f32 %v1976, %v1981
        %v1986 = vlaneseq
        %v1987 = vshrl.u32 %v1986, 7
        %v1988 = vsub.s32 0, %v1987
        %v1989 = vrot.slane %v1950, %v1988
        %v1991 = vadd.f32 %v1983, %v1989
        %v1992 = vadd.f32 %v1984, %v1989
        %v1993 = vmul.f32 %v1991, %v548
        %v1994 = vmul.f32 %v1992, %v553
        %1995 = vst [vmem:[%s509] sm:$0xff] %v1993
        %1996 = vst [vmem:[%s509 + $0x8] sm:$0xff] %v1994
        %v1997 = vpack.c.bf16 %v1994, %v1993
        %v1998 = vld [vmem:[#allocation9] sm:$0xff]
        %v1999 = vld [vmem:[#allocation9 + $0x8] sm:$0xff]
        %v2000 = vld [vmem:[#allocation9 + $0x10] sm:$0xff]
        %v2001 = vld [vmem:[#allocation9 + $0x18] sm:$0xff]
        %v2002 = vld [vmem:[#allocation9 + $0x20] sm:$0xff]
        %v2003 = vld [vmem:[#allocation9 + $0x28] sm:$0xff]
        %v2004 = vld [vmem:[#allocation9 + $0x30] sm:$0xff]
        %v2005 = vld [vmem:[#allocation9 + $0x38] sm:$0xff]
        %v2006 = vld [vmem:[#allocation9 + $0x40] sm:$0xff]
        %v2007 = vld [vmem:[#allocation9 + $0x48] sm:$0xff]
        %v2008 = vld [vmem:[#allocation9 + $0x50] sm:$0xff]
        %v2009 = vld [vmem:[#allocation9 + $0x58] sm:$0xff]
        %v2010 = vld [vmem:[#allocation9 + $0x60] sm:$0xff]
        %v2011 = vld [vmem:[#allocation9 + $0x68] sm:$0xff]
        %v2012 = vld [vmem:[#allocation9 + $0x70] sm:$0xff]
        %v2013 = vld [vmem:[#allocation9 + $0x78] sm:$0xff]
        %v2014 = vld [vmem:[%s10] sm:$0x3]
        %v2016 = vlaneseq
        %v2017 = vshrl.u32 %v2016, 7
        %v2018 = vsub.s32 0, %v2017
        %v2019 = vrot.slane %v2014, %v2018
        %v2020 = vlaneseq
        %v2021 = vshrl.u32 %v2020, 7
        %v2022 = vsub.s32 1, %v2021
        %v2023 = vrot.slane %v2014, %v2022
        %v2042 = vunpack.c.l.b16 %v1998
        %v2043 = vunpack.c.h.b16 %v1998
        %v2044 = vunpack.c.l.b16 %v1999
        %v2045 = vunpack.c.h.b16 %v1999
        %v2046 = vunpack.c.l.b16 %v2000
        %v2047 = vunpack.c.h.b16 %v2000
        %v2048 = vunpack.c.l.b16 %v2001
        %v2049 = vunpack.c.h.b16 %v2001
        %v2050 = vunpack.c.l.b16 %v2002
        %v2051 = vunpack.c.h.b16 %v2002
        %v2052 = vunpack.c.l.b16 %v2003
        %v2053 = vunpack.c.h.b16 %v2003
        %v2054 = vunpack.c.l.b16 %v2004
        %v2055 = vunpack.c.h.b16 %v2004
        %v2056 = vunpack.c.l.b16 %v2005
        %v2057 = vunpack.c.h.b16 %v2005
        %v2058 = vunpack.c.l.b16 %v2006
        %v2059 = vunpack.c.h.b16 %v2006
        %v2060 = vunpack.c.l.b16 %v2007
        %v2061 = vunpack.c.h.b16 %v2007
        %v2062 = vunpack.c.l.b16 %v2008
        %v2063 = vunpack.c.h.b16 %v2008
        %v2064 = vunpack.c.l.b16 %v2009
        %v2065 = vunpack.c.h.b16 %v2009
        %v2066 = vunpack.c.l.b16 %v2010
        %v2067 = vunpack.c.h.b16 %v2010
        %v2068 = vunpack.c.l.b16 %v2011
        %v2069 = vunpack.c.h.b16 %v2011
        %v2070 = vunpack.c.l.b16 %v2012
        %v2071 = vunpack.c.h.b16 %v2012
        %v2072 = vunpack.c.l.b16 %v2013
        %v2073 = vunpack.c.h.b16 %v2013
        %v2074 = vpack.c.b16 %v2044, %v2042
        %v2075 = vpack.c.b16 %v2045, %v2043
        %v2076 = vpack.c.b16 %v2048, %v2046
        %v2077 = vpack.c.b16 %v2049, %v2047
        %v2078 = vpack.c.b16 %v2052, %v2050
        %v2079 = vpack.c.b16 %v2053, %v2051
        %v2080 = vpack.c.b16 %v2056, %v2054
        %v2081 = vpack.c.b16 %v2057, %v2055
        %v2082 = vpack.c.b16 %v2060, %v2058
        %v2083 = vpack.c.b16 %v2061, %v2059
        %v2084 = vpack.c.b16 %v2064, %v2062
        %v2085 = vpack.c.b16 %v2065, %v2063
        %v2086 = vpack.c.b16 %v2068, %v2066
        %v2087 = vpack.c.b16 %v2069, %v2067
        %v2088 = vpack.c.b16 %v2072, %v2070
        %v2089 = vpack.c.b16 %v2073, %v2071
        %2106 = vmatprep.subr.bf16.mxu0 %v2089
        %2107 = vmatpush1.bf16.msra.mxu0 %v2088
        %2108 = vmatprep.subr.bf16.mxu0 %v2087
        %2109 = vmatpush1.bf16.msra.mxu0 %v2086
        %2110 = vmatprep.subr.bf16.mxu0 %v2085
        %2111 = vmatpush1.bf16.msra.mxu0 %v2084
        %2112 = vmatprep.subr.bf16.mxu0 %v2083
        %2113 = vmatpush1.bf16.msra.mxu0 %v2082
        %2114 = vmatprep.subr.bf16.mxu0 %v2081
        %2115 = vmatpush1.bf16.msra.mxu0 %v2080
        %2116 = vmatprep.subr.bf16.mxu0 %v2079
        %2117 = vmatpush1.bf16.msra.mxu0 %v2078
        %2118 = vmatprep.subr.bf16.mxu0 %v2077
        %2119 = vmatpush1.bf16.msra.mxu0 %v2076
        %2120 = vmatprep.subr.bf16.mxu0 %v2075
        %2121 = vmatpush1.bf16.msra.mxu0 %v2074
        %2122 = vmatprep.subr.bf16.mxu0 0
        %2123 = vmatpush2.bf16.msra.mxu0 0
        %2124 = vmatprep.subr.bf16.mxu0 0
        %2125 = vmatpush2.bf16.msra.mxu0 0
        %2126 = vmatprep.subr.bf16.mxu0 0
        %2127 = vmatpush2.bf16.msra.mxu0 0
        %2128 = vmatprep.subr.bf16.mxu0 0
        %2129 = vmatpush2.bf16.msra.mxu0 0
        %2130 = vmatprep.subr.bf16.mxu0 0
        %2131 = vmatpush2.bf16.msra.mxu0 0
        %2132 = vmatprep.subr.bf16.mxu0 0
        %2133 = vmatpush2.bf16.msra.mxu0 0
        %2134 = vmatprep.subr.bf16.mxu0 0
        %2135 = vmatpush2.bf16.msra.mxu0 0
        %2136 = vmatprep.subr.bf16.mxu0 0
        %2137 = vmatpush2.bf16.msra.mxu0 0
        %2138 = vmatprep.mubr.bf16.mxu0 0
        %2139 = vmatmul.mubr.bf16.gmra.mxu0 %v1997
        %v2140 = vpop.f32.mrf.mxu0
        %v2141 = vadd.f32 %v2019, %v2140
        %v2142 = vpop.f32.mrf.mxu0
        %v2143 = vadd.f32 %v2023, %v2142
        %v2144 = vpop.f32.mrf.mxu0
        %v2145 = vadd.f32 %v2019, %v2144
        %v2146 = vpop.f32.mrf.mxu0
        %v2147 = vadd.f32 %v2023, %v2146
        %2148 = vdwg.mxu0
        %v2149 = vmul.f32 %v2141, %v548
        %v2150 = vmul.f32 %v2145, %v553
        %2151 = vst [vmem:[%s516] sm:$0xff] %v2149
        %2152 = vst [vmem:[%s516 + $0x8] sm:$0xff] %v2150
        %v2153 = vmul.f32 %v2143, %v548
        %v2154 = vmul.f32 %v2147, %v553
        %2155 = vst [vmem:[%s523] sm:$0xff] %v2153
        %2156 = vst [vmem:[%s523 + $0x8] sm:$0xff] %v2154
        %s2157 = sand.u32 %s283, 1
        %s2158 = scalar_lea.sflag [#allocation5], %s2157
        %s2159 = sand.u32 %s283, 1
        %s2160 = smul.addr %s2159, 16
        %s2161 = scalar_lea.vmem [#allocation11], %s2160
        %s2162 = sand.u32 %s34, 1
        %s2163 = scalar_lea.sflag [#allocation13], %s2162
        %s2164 = sand.u32 %s309, 1
        %s2165 = smul.addr %s2164, 16
        %s2166 = scalar_lea.vmem [#allocation12], %s2165
        %s2167 = sand.u32 %s34, 1
        %s2168 = scalar_lea.sflag [#allocation13], %s2167
        %s2169 = sand.u32 %s335, 1
        %s2170 = smul.addr %s2169, 16
        %s2171 = scalar_lea.vmem [#allocation14], %s2170
        // Predicated region
        $region85: #{tpu_custom_call.1} parent=63 // pred_check
          %p2172 = pneg %p293
        $region86: #{tpu_custom_call.1} parent=63 // pred_check_branch
          %2174 = sbr.rel (%p2172) target = $region88
        $region87: #{tpu_custom_call.1} parent=63 // pred_region
          %s2176 = ssub.s32 256, 256
          %2177 = vsyncadd %s2158, %s2176
          %s2178 = smul.addr %s34, 2
          %s2179 = smul.addr %s2178, 128
          %s2180 = scalar_lea.hbm %s11, %s2179
          %s2181 = sshll.u32 %s2161, 4
          %s2182 = int_to_ptr.vmem [resolvable:$true] %s2181
          %2187 = dma.vmem_to_hbm [thread:$0]  %s2182, 256, %s2180, %s2158, 128, 128, 8
        $region88: #{tpu_custom_call.1} parent=63 // pred_fallthru
          _
        // Predicated region
        $region89: #{tpu_custom_call.1} parent=63 // pred_check
          %p2188 = pneg %p319
        $region90: #{tpu_custom_call.1} parent=63 // pred_check_branch
          %2190 = sbr.rel (%p2188) target = $region92
        $region91: #{tpu_custom_call.1} parent=63 // pred_region
          %s2192 = ssub.s32 256, 256
          %2193 = vsyncadd %s2163, %s2192
          %s2194 = smul.addr %s34, 2
          %s2195 = smul.addr %s2194, 128
          %s2196 = scalar_lea.hbm %s12, %s2195
          %s2197 = sshll.u32 %s2166, 4
          %s2198 = int_to_ptr.vmem [resolvable:$true] %s2197
          %2203 = dma.vmem_to_hbm [thread:$0]  %s2198, 256, %s2196, %s2163, 128, 128, 8
        $region92: #{tpu_custom_call.1} parent=63 // pred_fallthru
          _
        // Predicated region
        $region93: #{tpu_custom_call.1} parent=63 // pred_check
          %p2204 = pneg %p345
        $region94: #{tpu_custom_call.1} parent=63 // pred_check_branch
          %2206 = sbr.rel (%p2204) target = $region96
        $region95: #{tpu_custom_call.1} parent=63 // pred_region
          %s2208 = ssub.s32 256, 256
          %2209 = vsyncadd %s2168, %s2208
          %s2210 = smul.addr %s34, 2
          %s2211 = smul.addr %s2210, 128
          %s2212 = scalar_lea.hbm %s13, %s2211
          %s2213 = sshll.u32 %s2171, 4
          %s2214 = int_to_ptr.vmem [resolvable:$true] %s2213
          %2219 = dma.vmem_to_hbm [thread:$0]  %s2214, 256, %s2212, %s2168, 128, 128, 8
        $region96: #{tpu_custom_call.1} parent=63 // pred_fallthru
          _
      $region64: #{tpu_custom_call.1} parent=5 // pred_fallthru
        _
      %p2220 = scmp.le.s32.totalorder 2, %s29
      // Predicated region
      $region97: #{tpu_custom_call.1} parent=5 // pred_check
        %p2221 = pneg %p2220
      $region98: #{tpu_custom_call.1} parent=5 // pred_check_branch
        %2223 = sbr.rel (%p2221) target = $region100
      $region99: #{tpu_custom_call.1} parent=5 // pred_region
        %s2224 = ssub.s32 %s29, 2
        // Predicated region
        $region101: #{tpu_custom_call.1} parent=99 // pred_check
          %p2225 = pneg %p299
        $region102: #{tpu_custom_call.1} parent=99 // pred_check_branch
          %2227 = sbr.rel (%p2225) target = $region104
        $region103: #{tpu_custom_call.1} parent=99 // pred_region
          %s2228 = sand.u32 %s284, 1
          %s2229 = scalar_lea.sflag [#allocation5], %s2228
          %s2230 = sand.u32 %s284, 1
          %s2231 = smul.addr %s2230, 16
          %s2232 = scalar_lea.vmem [#allocation11], %s2231
          %2233 = dma.done %s2229, 256
        $region104: #{tpu_custom_call.1} parent=99 // pred_fallthru
          _
        // Predicated region
        $region105: #{tpu_custom_call.1} parent=99 // pred_check
          %p2234 = pneg %p325
        $region106: #{tpu_custom_call.1} parent=99 // pred_check_branch
          %2236 = sbr.rel (%p2234) target = $region108
        $region107: #{tpu_custom_call.1} parent=99 // pred_region
          %s2237 = sand.u32 %s35, 1
          %s2238 = scalar_lea.sflag [#allocation13], %s2237
          %s2239 = sand.u32 %s310, 1
          %s2240 = smul.addr %s2239, 16
          %s2241 = scalar_lea.vmem [#allocation12], %s2240
          %2242 = dma.done %s2238, 256
        $region108: #{tpu_custom_call.1} parent=99 // pred_fallthru
          _
        // Predicated region
        $region109: #{tpu_custom_call.1} parent=99 // pred_check
          %p2243 = pneg %p351
        $region110: #{tpu_custom_call.1} parent=99 // pred_check_branch
          %2245 = sbr.rel (%p2243) target = $region112
        $region111: #{tpu_custom_call.1} parent=99 // pred_region
          %s2246 = sand.u32 %s35, 1
          %s2247 = scalar_lea.sflag [#allocation13], %s2246
          %s2248 = sand.u32 %s336, 1
          %s2249 = smul.addr %s2248, 16
          %s2250 = scalar_lea.vmem [#allocation14], %s2249
          %2251 = dma.done %s2247, 256
        $region112: #{tpu_custom_call.1} parent=99 // pred_fallthru
          _
      $region100: #{tpu_custom_call.1} parent=5 // pred_fallthru
        _
    $region6: #{tpu_custom_call.1} parent=1 // loop_footer
      %s33 = sadd.s32 1, %s29
    $region7: #{tpu_custom_call.1} parent=1 // loop_footer_branch
      %28 = sbr.rel target = $region3
    $region8: #{tpu_custom_call.1} parent=1 // loop_exit
      _
    %2252 = vsyncpa [#allocation4], 1
    %s2253 = scalar_lea.sflag [#allocation4], 1
    %2254 = vsyncpa %s2253, 1
    %2255 = vsyncpa [#allocation7], 1
    %2256 = vsyncpa [#allocation10], 1
    %2257 = vsyncpa [#allocation5], 1
    %s2258 = scalar_lea.sflag [#allocation5], 1
    %2259 = vsyncpa %s2258, 1
    %2260 = vsyncpa [#allocation13], 1
    %s2261 = scalar_lea.sflag [#allocation13], 1
    %2262 = vsyncpa %s2261, 1

</llo_original>
